<compile_context>
chip_gen: v7x
topology: tpu7x:2x2x1
jax: 0.10.0
libtpu: 0.0.40
codegen_flags: <defaults>
</compile_context>

<pallas_src>
import jax
import jax.numpy as jnp
from jax.experimental import pallas as pl
from jax.experimental.pallas import tpu as pltpu


def _round_up(x, m):
    return (x + m - 1) // m * m


# ---------------------------------------------------------------------------
# Pallas kernel: tiled GEMM (MXU) -> + bias -> LeakyReLU(0.01) / identity
# ---------------------------------------------------------------------------
def _make_kernel(act: str, negative_slope: float = 0.01):
    def kernel(p_ref, w_ref, b_ref, o_ref, acc_ref):
        k = pl.program_id(2)

        @pl.when(k == 0)
        def _init():
            acc_ref[...] = jnp.zeros_like(acc_ref)

        # (TP, TK) bf16  x  (TK, Cn) bf16  ->  f32 accumulator on the MXU.
        acc_ref[...] += jnp.dot(p_ref[...], w_ref[...],
                                preferred_element_type=jnp.float32)

        @pl.when(k == pl.num_programs(2) - 1)
        def _finalize():
            y = acc_ref[...] + b_ref[...]           # (TP, Cn) + (1, Cn)
            if act == "lrelu":
                # LeakyReLU(0.01): max(y, 0.01*y) is exact for slope in (0,1).
                y = jnp.maximum(y, negative_slope * y)
            o_ref[...] = y.astype(o_ref.dtype)

    return kernel


def conv_gemm_pallas(patches, w_mat, bias, *, act, out_dtype):
    """patches: (N, P, K); w_mat: (K, Cout); bias: (Cout,) -> (N, P, Cout)."""
    N, P, K = patches.shape
    Cout = w_mat.shape[1]

    # Lane / sublane friendly padded sizes (last dim multiple of 128,
    # second-to-last multiple of 8) and tile sizes that divide them.
    Cn = _round_up(Cout, 128)
    Kp = _round_up(K, 128)
    TP = 512 if P >= 512 else _round_up(P, 8)
    Pp = _round_up(P, TP)
    TK = 512 if Kp % 512 == 0 else (256 if Kp % 256 == 0 else 128)

    patches = jnp.pad(patches.astype(jnp.bfloat16),
                      ((0, 0), (0, Pp - P), (0, Kp - K)))
    w_mat = jnp.pad(w_mat.astype(jnp.bfloat16),
                    ((0, Kp - K), (0, Cn - Cout)))
    bias = jnp.pad(bias.astype(jnp.float32), (0, Cn - Cout)).reshape(1, Cn)

    out = pl.pallas_call(
        _make_kernel(act),
        out_shape=jax.ShapeDtypeStruct((N, Pp, Cn), out_dtype),
        grid=(N, Pp // TP, Kp // TK),
        in_specs=[
            # Leading batch dim squeezed out of the kernel Ref.
            pl.BlockSpec((None, TP, TK), lambda n, p, k: (n, p, k)),
            pl.BlockSpec((TK, Cn), lambda n, p, k: (k, 0)),
            # Constant index map -> bias tile stays resident across the grid.
            pl.BlockSpec((1, Cn), lambda n, p, k: (0, 0)),
        ],
        out_specs=pl.BlockSpec((None, TP, Cn), lambda n, p, k: (n, p, 0)),
        scratch_shapes=[pltpu.VMEM((TP, Cn), jnp.float32)],
        compiler_params=pltpu.CompilerParams(
            dimension_semantics=("parallel", "parallel", "arbitrary")),
    )(patches, w_mat, bias)

    return out[:, :P, :Cout]


# ---------------------------------------------------------------------------
# JAX glue: im2col + conv layer wrapper
# ---------------------------------------------------------------------------
def _im2col(x, k, stride, pad):
    """x: (N, H, W, C) NHWC -> (N, Hout*Wout, k*k*C), Hout, Wout."""
    if pad:
        x = jnp.pad(x, ((0, 0), (pad, pad), (pad, pad), (0, 0)))
    N, Hp, Wp, C = x.shape
    Hout = (Hp - k) // stride + 1
    Wout = (Wp - k) // stride + 1
    cols = []
    for kh in range(k):
        for kw in range(k):
            cols.append(x[:, kh:kh + (Hout - 1) * stride + 1:stride,
                            kw:kw + (Wout - 1) * stride + 1:stride, :])
    p = jnp.stack(cols, axis=3)  # (N, Hout, Wout, k*k, C)
    return p.reshape(N, Hout * Wout, k * k * C), Hout, Wout


def conv2d_layer(x, w_oihw, bias, *, stride, pad, act, out_dtype):
    """Conv2d [+ bias] [+ LeakyReLU(0.01)] on an NHWC input."""
    N, H, W, Cin = x.shape
    Cout, _, k, _ = w_oihw.shape
    # Patches are emitted in bf16 (halves HBM traffic) and consumed one
    # (TP, TK) tile at a time inside the Pallas kernel, so only small tiles
    # ever live in VMEM even at full StarGAN resolutions.
    patches, Hout, Wout = _im2col(x, k, stride, pad)
    # patch order (kh, kw, cin) matches weight reshaped as (kh, kw, cin, cout)
    w_mat = jnp.transpose(w_oihw, (2, 3, 1, 0)).reshape(k * k * Cin, Cout)
    if bias is None:
        bias = jnp.zeros((Cout,), jnp.float32)
    y = conv_gemm_pallas(patches, w_mat, bias, act=act, out_dtype=out_dtype)
    return y.reshape(N, Hout, Wout, Cout)


# ---------------------------------------------------------------------------
# Parameter construction (deterministic, synthetic)
# ---------------------------------------------------------------------------
def init_params(key, image_size, conv_dim, c_dim, repeat_num):
    keys = iter(jax.random.split(key, 2 * repeat_num + 4))

    def conv_w(o, i, k):
        return 0.05 * jax.random.normal(next(keys), (o, i, k, k), jnp.float32)

    def conv_b(o):
        return 0.05 * jax.random.normal(next(keys), (o,), jnp.float32)

    main = []
    main.append((conv_w(conv_dim, 3, 4), conv_b(conv_dim)))   # Conv2d(3, conv_dim)
    curr = conv_dim
    for _ in range(1, repeat_num):
        main.append((conv_w(curr * 2, curr, 4), conv_b(curr * 2)))
        curr *= 2

    k_size = image_size // (2 ** repeat_num)
    return {
        "main": main,
        "w_conv1": conv_w(1, curr, 3),          # bias=False
        "w_conv2": conv_w(c_dim, curr, k_size), # bias=False
    }


# ---------------------------------------------------------------------------
# Full Discriminator forward (matches the PyTorch module semantics)
# ---------------------------------------------------------------------------
def discriminator_forward(x_nchw, params):
    h = jnp.transpose(x_nchw, (0, 2, 3, 1))     # NCHW -> NHWC
    out_feats = []
    for i, (w, b) in enumerate(params["main"]):
        h = conv2d_layer(h, w, b, stride=2, pad=1, act="lrelu",
                         out_dtype=jnp.bfloat16)
        if i < 4:
            feat = jnp.transpose(h, (0, 3, 1, 2)).astype(jnp.float32)  # NCHW
            out_feats.append(jnp.squeeze(feat))

    out_real = conv2d_layer(h, params["w_conv1"], None, stride=1, pad=1,
                            act="none", out_dtype=jnp.float32)
    out_aux = conv2d_layer(h, params["w_conv2"], None, stride=1, pad=0,
                           act="none", out_dtype=jnp.float32)

    out_real = jnp.squeeze(jnp.transpose(out_real, (0, 3, 1, 2)))  # (N, k, k)
    out_aux = jnp.squeeze(jnp.transpose(out_aux, (0, 3, 1, 2)))    # (N, c_dim)
    return out_real, out_aux, out_feats


if __name__ == "__main__":
    key = jax.random.PRNGKey(0)
    kx, kp = jax.random.split(key)

    # Small config consistent with the module's constructor.
    N, image_size = 2, 16
    conv_dim, c_dim, repeat_num = 8, 4, 2
    k_size = image_size // (2 ** repeat_num)    # 4

    x = jax.random.normal(kx, (N, 3, image_size, image_size), jnp.float32)
    params = init_params(kp, image_size, conv_dim, c_dim, repeat_num)

    fwd = jax.jit(discriminator_forward)
    out_real, out_aux, out_feats = jax.block_until_ready(fwd(x, params))

    assert out_real.shape == (N, k_size, k_size), out_real.shape
    assert out_aux.shape == (N, c_dim), out_aux.shape
    assert len(out_feats) == min(repeat_num, 4), len(out_feats)
    assert out_feats[0].shape == (N, conv_dim, image_size // 2, image_size // 2)
    assert out_feats[1].shape == (N, conv_dim * 2, image_size // 4, image_size // 4)
    assert all(bool(jnp.all(jnp.isfinite(f)))
               for f in [out_real, out_aux] + list(out_feats))
    print("KERNEL_OK")
</pallas_src>

<mosaic_0001>
module attributes {stable_mosaic.version = 11 : i64} {
  func.func @kernel(%arg0: i32, %arg1: i32, %arg2: i32, %arg3: memref<1x64x128xbf16, #tpu.memory_space<vmem>>, %arg4: memref<128x128xbf16, #tpu.memory_space<vmem>>, %arg5: memref<1x128xf32, #tpu.memory_space<vmem>>, %arg6: memref<1x64x128xbf16, #tpu.memory_space<vmem>>, %arg7: memref<64x128xf32, #tpu.memory_space<vmem>>) attributes {dimension_semantics = [#tpu.dimension_semantics<parallel>, #tpu.dimension_semantics<parallel>, #tpu.dimension_semantics<arbitrary>], iteration_bounds = array<i64: 2, 1, 1>, scalar_prefetch = 0 : i64, scratch_operands = 1 : i64, tpu.core_type = #tpu.core_type<tc>, window_params = [{transform_indices = @transform_0, window_bounds = array<i64: 1, 64, 128>}, {transform_indices = @transform_1, window_bounds = array<i64: 128, 128>}, {pipeline_mode = #tpu.pipeline_mode<synchronous>, transform_indices = @transform_2, window_bounds = array<i64: 1, 128>}, {transform_indices = @transform_3, window_bounds = array<i64: 1, 64, 128>}]} {
    %c0_i32 = arith.constant 0 : i32
    %0 = arith.cmpi eq, %arg2, %c0_i32 : i32
    %1 = arith.extui %0 : i1 to i32
    %c0_i32_0 = arith.constant 0 : i32
    %2 = arith.cmpi ne, %1, %c0_i32_0 : i32
    scf.if %2 {
      %cst_11 = arith.constant 0.000000e+00 : f32
      %13 = vector.broadcast %cst_11 : f32 to vector<64x128xf32>
      %c0_12 = arith.constant 0 : index
      %c0_13 = arith.constant 0 : index
      %14 = vector.load %arg7[%c0_12, %c0_13] : memref<64x128xf32, #tpu.memory_space<vmem>>, vector<64x128xf32>
      tpu.vector_store %arg7[%c0_12, %c0_13], %13 {strides = array<i32>} : memref<64x128xf32, #tpu.memory_space<vmem>>, vector<64x128xf32>,
    } else {
    }
    %c0 = arith.constant 0 : index
    %c0_1 = arith.constant 0 : index
    %3 = vector.load %arg7[%c0, %c0_1] : memref<64x128xf32, #tpu.memory_space<vmem>>, vector<64x128xf32>
    %c0_2 = arith.constant 0 : index
    %c0_3 = arith.constant 0 : index
    %c0_4 = arith.constant 0 : index
    %4 = vector.load %arg3[%c0_2, %c0_3, %c0_4] : memref<1x64x128xbf16, #tpu.memory_space<vmem>>, vector<1x64x128xbf16>
    %5 = vector.shape_cast %4 : vector<1x64x128xbf16> to vector<64x128xbf16>
    %c0_5 = arith.constant 0 : index
    %c0_6 = arith.constant 0 : index
    %6 = vector.load %arg4[%c0_5, %c0_6] : memref<128x128xbf16, #tpu.memory_space<vmem>>, vector<128x128xbf16>
    %cst = arith.constant dense<0.000000e+00> : vector<64x128xf32>
    %7 = tpu.matmul %5, %6, %cst {dimension_numbers = #tpu.dot_dimension_numbers<[1], [0], [0], [1], [0, 0, 1, 1], [], []>} : vector<64x128xbf16>, vector<128x128xbf16>, vector<64x128xf32> -> vector<64x128xf32>
    %8 = arith.addf %3, %7 : vector<64x128xf32>
    %c0_7 = arith.constant 0 : index
    %c0_8 = arith.constant 0 : index
    %9 = vector.load %arg7[%c0_7, %c0_8] : memref<64x128xf32, #tpu.memory_space<vmem>>, vector<64x128xf32>
    tpu.vector_store %arg7[%c0_7, %c0_8], %8 {strides = array<i32>} : memref<64x128xf32, #tpu.memory_space<vmem>>, vector<64x128xf32>,
    %c0_i32_9 = arith.constant 0 : i32
    %10 = arith.cmpi eq, %arg2, %c0_i32_9 : i32
    %11 = arith.extui %10 : i1 to i32
    %c0_i32_10 = arith.constant 0 : i32
    %12 = arith.cmpi ne, %11, %c0_i32_10 : i32
    scf.if %12 {
      %c0_11 = arith.constant 0 : index
      %c0_12 = arith.constant 0 : index
      %13 = vector.load %arg7[%c0_11, %c0_12] : memref<64x128xf32, #tpu.memory_space<vmem>>, vector<64x128xf32>
      %c0_13 = arith.constant 0 : index
      %c0_14 = arith.constant 0 : index
      %14 = vector.load %arg5[%c0_13, %c0_14] : memref<1x128xf32, #tpu.memory_space<vmem>>, vector<1x128xf32>
      %15 = vector.broadcast %14 : vector<1x128xf32> to vector<64x128xf32>
      %16 = arith.addf %13, %15 : vector<64x128xf32>
      %cst_15 = arith.constant 0.00999999977 : f32
      %17 = vector.broadcast %cst_15 : f32 to vector<64x128xf32>
      %18 = arith.mulf %17, %16 : vector<64x128xf32>
      %19 = arith.maximumf %16, %18 : vector<64x128xf32>
      %20 = arith.truncf %19 : vector<64x128xf32> to vector<64x128xbf16>
      %c0_16 = arith.constant 0 : index
      %c0_17 = arith.constant 0 : index
      %c0_18 = arith.constant 0 : index
      %21 = vector.load %arg6[%c0_16, %c0_17, %c0_18] : memref<1x64x128xbf16, #tpu.memory_space<vmem>>, vector<1x64x128xbf16>
      %22 = vector.shape_cast %21 : vector<1x64x128xbf16> to vector<64x128xbf16>
      %23 = vector.shape_cast %20 : vector<64x128xbf16> to vector<1x64x128xbf16>
      tpu.vector_store %arg6[%c0_16, %c0_17, %c0_18], %23 {strides = array<i32>} : memref<1x64x128xbf16, #tpu.memory_space<vmem>>, vector<1x64x128xbf16>,
    } else {
    }
    return
  }
  func.func @transform_0(%arg0: i32, %arg1: i32, %arg2: i32) -> (i32, i32, i32) {
    %c0_i32 = arith.constant 0 : i32
    return %arg0, %arg1, %arg2 : i32, i32, i32
  }
  func.func @transform_1(%arg0: i32, %arg1: i32, %arg2: i32) -> (i32, i32) {
    %c0_i32 = arith.constant 0 : i32
    %c0_i32_0 = arith.constant 0 : i32
    return %arg2, %c0_i32 : i32, i32
  }
  func.func @transform_2(%arg0: i32, %arg1: i32, %arg2: i32) -> (i32, i32) {
    %c0_i32 = arith.constant 0 : i32
    %c0_i32_0 = arith.constant 0 : i32
    %c0_i32_1 = arith.constant 0 : i32
    return %c0_i32, %c0_i32_0 : i32, i32
  }
  func.func @transform_3(%arg0: i32, %arg1: i32, %arg2: i32) -> (i32, i32, i32) {
    %c0_i32 = arith.constant 0 : i32
    %c0_i32_0 = arith.constant 0 : i32
    return %arg0, %arg1, %c0_i32 : i32, i32, i32
  }
}

module attributes {stable_mosaic.version = 11 : i64} {
  func.func @kernel(%arg0: i32, %arg1: i32, %arg2: i32, %arg3: memref<1x16x128xbf16, #tpu.memory_space<vmem>>, %arg4: memref<128x128xbf16, #tpu.memory_space<vmem>>, %arg5: memref<1x128xf32, #tpu.memory_space<vmem>>, %arg6: memref<1x16x128xbf16, #tpu.memory_space<vmem>>, %arg7: memref<16x128xf32, #tpu.memory_space<vmem>>) attributes {dimension_semantics = [#tpu.dimension_semantics<parallel>, #tpu.dimension_semantics<parallel>, #tpu.dimension_semantics<arbitrary>], iteration_bounds = array<i64: 2, 1, 1>, scalar_prefetch = 0 : i64, scratch_operands = 1 : i64, tpu.core_type = #tpu.core_type<tc>, window_params = [{transform_indices = @transform_0, window_bounds = array<i64: 1, 16, 128>}, {transform_indices = @transform_1, window_bounds = array<i64: 128, 128>}, {pipeline_mode = #tpu.pipeline_mode<synchronous>, transform_indices = @transform_2, window_bounds = array<i64: 1, 128>}, {transform_indices = @transform_3, window_bounds = array<i64: 1, 16, 128>}]} {
    %c0_i32 = arith.constant 0 : i32
    %0 = arith.cmpi eq, %arg2, %c0_i32 : i32
    %1 = arith.extui %0 : i1 to i32
    %c0_i32_0 = arith.constant 0 : i32
    %2 = arith.cmpi ne, %1, %c0_i32_0 : i32
    scf.if %2 {
      %cst_11 = arith.constant 0.000000e+00 : f32
      %13 = vector.broadcast %cst_11 : f32 to vector<16x128xf32>
      %c0_12 = arith.constant 0 : index
      %c0_13 = arith.constant 0 : index
      %14 = vector.load %arg7[%c0_12, %c0_13] : memref<16x128xf32, #tpu.memory_space<vmem>>, vector<16x128xf32>
      tpu.vector_store %arg7[%c0_12, %c0_13], %13 {strides = array<i32>} : memref<16x128xf32, #tpu.memory_space<vmem>>, vector<16x128xf32>,
    } else {
    }
    %c0 = arith.constant 0 : index
    %c0_1 = arith.constant 0 : index
    %3 = vector.load %arg7[%c0, %c0_1] : memref<16x128xf32, #tpu.memory_space<vmem>>, vector<16x128xf32>
    %c0_2 = arith.constant 0 : index
    %c0_3 = arith.constant 0 : index
    %c0_4 = arith.constant 0 : index
    %4 = vector.load %arg3[%c0_2, %c0_3, %c0_4] : memref<1x16x128xbf16, #tpu.memory_space<vmem>>, vector<1x16x128xbf16>
    %5 = vector.shape_cast %4 : vector<1x16x128xbf16> to vector<16x128xbf16>
    %c0_5 = arith.constant 0 : index
    %c0_6 = arith.constant 0 : index
    %6 = vector.load %arg4[%c0_5, %c0_6] : memref<128x128xbf16, #tpu.memory_space<vmem>>, vector<128x128xbf16>
    %cst = arith.constant dense<0.000000e+00> : vector<16x128xf32>
    %7 = tpu.matmul %5, %6, %cst {dimension_numbers = #tpu.dot_dimension_numbers<[1], [0], [0], [1], [0, 0, 1, 1], [], []>} : vector<16x128xbf16>, vector<128x128xbf16>, vector<16x128xf32> -> vector<16x128xf32>
    %8 = arith.addf %3, %7 : vector<16x128xf32>
    %c0_7 = arith.constant 0 : index
    %c0_8 = arith.constant 0 : index
    %9 = vector.load %arg7[%c0_7, %c0_8] : memref<16x128xf32, #tpu.memory_space<vmem>>, vector<16x128xf32>
    tpu.vector_store %arg7[%c0_7, %c0_8], %8 {strides = array<i32>} : memref<16x128xf32, #tpu.memory_space<vmem>>, vector<16x128xf32>,
    %c0_i32_9 = arith.constant 0 : i32
    %10 = arith.cmpi eq, %arg2, %c0_i32_9 : i32
    %11 = arith.extui %10 : i1 to i32
    %c0_i32_10 = arith.constant 0 : i32
    %12 = arith.cmpi ne, %11, %c0_i32_10 : i32
    scf.if %12 {
      %c0_11 = arith.constant 0 : index
      %c0_12 = arith.constant 0 : index
      %13 = vector.load %arg7[%c0_11, %c0_12] : memref<16x128xf32, #tpu.memory_space<vmem>>, vector<16x128xf32>
      %c0_13 = arith.constant 0 : index
      %c0_14 = arith.constant 0 : index
      %14 = vector.load %arg5[%c0_13, %c0_14] : memref<1x128xf32, #tpu.memory_space<vmem>>, vector<1x128xf32>
      %15 = vector.broadcast %14 : vector<1x128xf32> to vector<16x128xf32>
      %16 = arith.addf %13, %15 : vector<16x128xf32>
      %cst_15 = arith.constant 0.00999999977 : f32
      %17 = vector.broadcast %cst_15 : f32 to vector<16x128xf32>
      %18 = arith.mulf %17, %16 : vector<16x128xf32>
      %19 = arith.maximumf %16, %18 : vector<16x128xf32>
      %20 = arith.truncf %19 : vector<16x128xf32> to vector<16x128xbf16>
      %c0_16 = arith.constant 0 : index
      %c0_17 = arith.constant 0 : index
      %c0_18 = arith.constant 0 : index
      %21 = vector.load %arg6[%c0_16, %c0_17, %c0_18] : memref<1x16x128xbf16, #tpu.memory_space<vmem>>, vector<1x16x128xbf16>
      %22 = vector.shape_cast %21 : vector<1x16x128xbf16> to vector<16x128xbf16>
      %23 = vector.shape_cast %20 : vector<16x128xbf16> to vector<1x16x128xbf16>
      tpu.vector_store %arg6[%c0_16, %c0_17, %c0_18], %23 {strides = array<i32>} : memref<1x16x128xbf16, #tpu.memory_space<vmem>>, vector<1x16x128xbf16>,
    } else {
    }
    return
  }
  func.func @transform_0(%arg0: i32, %arg1: i32, %arg2: i32) -> (i32, i32, i32) {
    %c0_i32 = arith.constant 0 : i32
    return %arg0, %arg1, %arg2 : i32, i32, i32
  }
  func.func @transform_1(%arg0: i32, %arg1: i32, %arg2: i32) -> (i32, i32) {
    %c0_i32 = arith.constant 0 : i32
    %c0_i32_0 = arith.constant 0 : i32
    return %arg2, %c0_i32 : i32, i32
  }
  func.func @transform_2(%arg0: i32, %arg1: i32, %arg2: i32) -> (i32, i32) {
    %c0_i32 = arith.constant 0 : i32
    %c0_i32_0 = arith.constant 0 : i32
    %c0_i32_1 = arith.constant 0 : i32
    return %c0_i32, %c0_i32_0 : i32, i32
  }
  func.func @transform_3(%arg0: i32, %arg1: i32, %arg2: i32) -> (i32, i32, i32) {
    %c0_i32 = arith.constant 0 : i32
    %c0_i32_0 = arith.constant 0 : i32
    return %arg0, %arg1, %c0_i32 : i32, i32, i32
  }
}

module attributes {stable_mosaic.version = 11 : i64} {
  func.func @kernel(%arg0: i32, %arg1: i32, %arg2: i32, %arg3: memref<1x8x256xbf16, #tpu.memory_space<vmem>>, %arg4: memref<256x128xbf16, #tpu.memory_space<vmem>>, %arg5: memref<1x128xf32, #tpu.memory_space<vmem>>, %arg6: memref<1x8x128xf32, #tpu.memory_space<vmem>>, %arg7: memref<8x128xf32, #tpu.memory_space<vmem>>) attributes {dimension_semantics = [#tpu.dimension_semantics<parallel>, #tpu.dimension_semantics<parallel>, #tpu.dimension_semantics<arbitrary>], iteration_bounds = array<i64: 2, 1, 1>, scalar_prefetch = 0 : i64, scratch_operands = 1 : i64, tpu.core_type = #tpu.core_type<tc>, window_params = [{transform_indices = @transform_0, window_bounds = array<i64: 1, 8, 256>}, {transform_indices = @transform_1, window_bounds = array<i64: 256, 128>}, {pipeline_mode = #tpu.pipeline_mode<synchronous>, transform_indices = @transform_2, window_bounds = array<i64: 1, 128>}, {transform_indices = @transform_3, window_bounds = array<i64: 1, 8, 128>}]} {
    %c0_i32 = arith.constant 0 : i32
    %0 = arith.cmpi eq, %arg2, %c0_i32 : i32
    %1 = arith.extui %0 : i1 to i32
    %c0_i32_0 = arith.constant 0 : i32
    %2 = arith.cmpi ne, %1, %c0_i32_0 : i32
    scf.if %2 {
      %cst_11 = arith.constant 0.000000e+00 : f32
      %13 = vector.broadcast %cst_11 : f32 to vector<8x128xf32>
      %c0_12 = arith.constant 0 : index
      %c0_13 = arith.constant 0 : index
      %14 = vector.load %arg7[%c0_12, %c0_13] : memref<8x128xf32, #tpu.memory_space<vmem>>, vector<8x128xf32>
      tpu.vector_store %arg7[%c0_12, %c0_13], %13 {strides = array<i32>} : memref<8x128xf32, #tpu.memory_space<vmem>>, vector<8x128xf32>,
    } else {
    }
    %c0 = arith.constant 0 : index
    %c0_1 = arith.constant 0 : index
    %3 = vector.load %arg7[%c0, %c0_1] : memref<8x128xf32, #tpu.memory_space<vmem>>, vector<8x128xf32>
    %c0_2 = arith.constant 0 : index
    %c0_3 = arith.constant 0 : index
    %c0_4 = arith.constant 0 : index
    %4 = vector.load %arg3[%c0_2, %c0_3, %c0_4] : memref<1x8x256xbf16, #tpu.memory_space<vmem>>, vector<1x8x256xbf16>
    %5 = vector.shape_cast %4 : vector<1x8x256xbf16> to vector<8x256xbf16>
    %c0_5 = arith.constant 0 : index
    %c0_6 = arith.constant 0 : index
    %6 = vector.load %arg4[%c0_5, %c0_6] : memref<256x128xbf16, #tpu.memory_space<vmem>>, vector<256x128xbf16>
    %cst = arith.constant dense<0.000000e+00> : vector<8x128xf32>
    %7 = tpu.matmul %5, %6, %cst {dimension_numbers = #tpu.dot_dimension_numbers<[1], [0], [0], [1], [0, 0, 1, 1], [], []>} : vector<8x256xbf16>, vector<256x128xbf16>, vector<8x128xf32> -> vector<8x128xf32>
    %8 = arith.addf %3, %7 : vector<8x128xf32>
    %c0_7 = arith.constant 0 : index
    %c0_8 = arith.constant 0 : index
    %9 = vector.load %arg7[%c0_7, %c0_8] : memref<8x128xf32, #tpu.memory_space<vmem>>, vector<8x128xf32>
    tpu.vector_store %arg7[%c0_7, %c0_8], %8 {strides = array<i32>} : memref<8x128xf32, #tpu.memory_space<vmem>>, vector<8x128xf32>,
    %c0_i32_9 = arith.constant 0 : i32
    %10 = arith.cmpi eq, %arg2, %c0_i32_9 : i32
    %11 = arith.extui %10 : i1 to i32
    %c0_i32_10 = arith.constant 0 : i32
    %12 = arith.cmpi ne, %11, %c0_i32_10 : i32
    scf.if %12 {
      %c0_11 = arith.constant 0 : index
      %c0_12 = arith.constant 0 : index
      %13 = vector.load %arg7[%c0_11, %c0_12] : memref<8x128xf32, #tpu.memory_space<vmem>>, vector<8x128xf32>
      %c0_13 = arith.constant 0 : index
      %c0_14 = arith.constant 0 : index
      %14 = vector.load %arg5[%c0_13, %c0_14] : memref<1x128xf32, #tpu.memory_space<vmem>>, vector<1x128xf32>
      %15 = vector.broadcast %14 : vector<1x128xf32> to vector<8x128xf32>
      %16 = arith.addf %13, %15 : vector<8x128xf32>
      %c0_15 = arith.constant 0 : index
      %c0_16 = arith.constant 0 : index
      %c0_17 = arith.constant 0 : index
      %17 = vector.load %arg6[%c0_15, %c0_16, %c0_17] : memref<1x8x128xf32, #tpu.memory_space<vmem>>, vector<1x8x128xf32>
      %18 = vector.shape_cast %17 : vector<1x8x128xf32> to vector<8x128xf32>
      %19 = vector.shape_cast %16 : vector<8x128xf32> to vector<1x8x128xf32>
      tpu.vector_store %arg6[%c0_15, %c0_16, %c0_17], %19 {strides = array<i32>} : memref<1x8x128xf32, #tpu.memory_space<vmem>>, vector<1x8x128xf32>,
    } else {
    }
    return
  }
  func.func @transform_0(%arg0: i32, %arg1: i32, %arg2: i32) -> (i32, i32, i32) {
    %c0_i32 = arith.constant 0 : i32
    return %arg0, %arg1, %arg2 : i32, i32, i32
  }
  func.func @transform_1(%arg0: i32, %arg1: i32, %arg2: i32) -> (i32, i32) {
    %c0_i32 = arith.constant 0 : i32
    %c0_i32_0 = arith.constant 0 : i32
    return %arg2, %c0_i32 : i32, i32
  }
  func.func @transform_2(%arg0: i32, %arg1: i32, %arg2: i32) -> (i32, i32) {
    %c0_i32 = arith.constant 0 : i32
    %c0_i32_0 = arith.constant 0 : i32
    %c0_i32_1 = arith.constant 0 : i32
    return %c0_i32, %c0_i32_0 : i32, i32
  }
  func.func @transform_3(%arg0: i32, %arg1: i32, %arg2: i32) -> (i32, i32, i32) {
    %c0_i32 = arith.constant 0 : i32
    %c0_i32_0 = arith.constant 0 : i32
    return %arg0, %arg1, %c0_i32 : i32, i32, i32
  }
}

module attributes {stable_mosaic.version = 11 : i64} {
  func.func @kernel(%arg0: i32, %arg1: i32, %arg2: i32, %arg3: memref<1x16x256xbf16, #tpu.memory_space<vmem>>, %arg4: memref<256x128xbf16, #tpu.memory_space<vmem>>, %arg5: memref<1x128xf32, #tpu.memory_space<vmem>>, %arg6: memref<1x16x128xf32, #tpu.memory_space<vmem>>, %arg7: memref<16x128xf32, #tpu.memory_space<vmem>>) attributes {dimension_semantics = [#tpu.dimension_semantics<parallel>, #tpu.dimension_semantics<parallel>, #tpu.dimension_semantics<arbitrary>], iteration_bounds = array<i64: 2, 1, 1>, scalar_prefetch = 0 : i64, scratch_operands = 1 : i64, tpu.core_type = #tpu.core_type<tc>, window_params = [{transform_indices = @transform_0, window_bounds = array<i64: 1, 16, 256>}, {transform_indices = @transform_1, window_bounds = array<i64: 256, 128>}, {pipeline_mode = #tpu.pipeline_mode<synchronous>, transform_indices = @transform_2, window_bounds = array<i64: 1, 128>}, {transform_indices = @transform_3, window_bounds = array<i64: 1, 16, 128>}]} {
    %c0_i32 = arith.constant 0 : i32
    %0 = arith.cmpi eq, %arg2, %c0_i32 : i32
    %1 = arith.extui %0 : i1 to i32
    %c0_i32_0 = arith.constant 0 : i32
    %2 = arith.cmpi ne, %1, %c0_i32_0 : i32
    scf.if %2 {
      %cst_11 = arith.constant 0.000000e+00 : f32
      %13 = vector.broadcast %cst_11 : f32 to vector<16x128xf32>
      %c0_12 = arith.constant 0 : index
      %c0_13 = arith.constant 0 : index
      %14 = vector.load %arg7[%c0_12, %c0_13] : memref<16x128xf32, #tpu.memory_space<vmem>>, vector<16x128xf32>
      tpu.vector_store %arg7[%c0_12, %c0_13], %13 {strides = array<i32>} : memref<16x128xf32, #tpu.memory_space<vmem>>, vector<16x128xf32>,
    } else {
    }
    %c0 = arith.constant 0 : index
    %c0_1 = arith.constant 0 : index
    %3 = vector.load %arg7[%c0, %c0_1] : memref<16x128xf32, #tpu.memory_space<vmem>>, vector<16x128xf32>
    %c0_2 = arith.constant 0 : index
    %c0_3 = arith.constant 0 : index
    %c0_4 = arith.constant 0 : index
    %4 = vector.load %arg3[%c0_2, %c0_3, %c0_4] : memref<1x16x256xbf16, #tpu.memory_space<vmem>>, vector<1x16x256xbf16>
    %5 = vector.shape_cast %4 : vector<1x16x256xbf16> to vector<16x256xbf16>
    %c0_5 = arith.constant 0 : index
    %c0_6 = arith.constant 0 : index
    %6 = vector.load %arg4[%c0_5, %c0_6] : memref<256x128xbf16, #tpu.memory_space<vmem>>, vector<256x128xbf16>
    %cst = arith.constant dense<0.000000e+00> : vector<16x128xf32>
    %7 = tpu.matmul %5, %6, %cst {dimension_numbers = #tpu.dot_dimension_numbers<[1], [0], [0], [1], [0, 0, 1, 1], [], []>} : vector<16x256xbf16>, vector<256x128xbf16>, vector<16x128xf32> -> vector<16x128xf32>
    %8 = arith.addf %3, %7 : vector<16x128xf32>
    %c0_7 = arith.constant 0 : index
    %c0_8 = arith.constant 0 : index
    %9 = vector.load %arg7[%c0_7, %c0_8] : memref<16x128xf32, #tpu.memory_space<vmem>>, vector<16x128xf32>
    tpu.vector_store %arg7[%c0_7, %c0_8], %8 {strides = array<i32>} : memref<16x128xf32, #tpu.memory_space<vmem>>, vector<16x128xf32>,
    %c0_i32_9 = arith.constant 0 : i32
    %10 = arith.cmpi eq, %arg2, %c0_i32_9 : i32
    %11 = arith.extui %10 : i1 to i32
    %c0_i32_10 = arith.constant 0 : i32
    %12 = arith.cmpi ne, %11, %c0_i32_10 : i32
    scf.if %12 {
      %c0_11 = arith.constant 0 : index
      %c0_12 = arith.constant 0 : index
      %13 = vector.load %arg7[%c0_11, %c0_12] : memref<16x128xf32, #tpu.memory_space<vmem>>, vector<16x128xf32>
      %c0_13 = arith.constant 0 : index
      %c0_14 = arith.constant 0 : index
      %14 = vector.load %arg5[%c0_13, %c0_14] : memref<1x128xf32, #tpu.memory_space<vmem>>, vector<1x128xf32>
      %15 = vector.broadcast %14 : vector<1x128xf32> to vector<16x128xf32>
      %16 = arith.addf %13, %15 : vector<16x128xf32>
      %c0_15 = arith.constant 0 : index
      %c0_16 = arith.constant 0 : index
      %c0_17 = arith.constant 0 : index
      %17 = vector.load %arg6[%c0_15, %c0_16, %c0_17] : memref<1x16x128xf32, #tpu.memory_space<vmem>>, vector<1x16x128xf32>
      %18 = vector.shape_cast %17 : vector<1x16x128xf32> to vector<16x128xf32>
      %19 = vector.shape_cast %16 : vector<16x128xf32> to vector<1x16x128xf32>
      tpu.vector_store %arg6[%c0_15, %c0_16, %c0_17], %19 {strides = array<i32>} : memref<1x16x128xf32, #tpu.memory_space<vmem>>, vector<1x16x128xf32>,
    } else {
    }
    return
  }
  func.func @transform_0(%arg0: i32, %arg1: i32, %arg2: i32) -> (i32, i32, i32) {
    %c0_i32 = arith.constant 0 : i32
    return %arg0, %arg1, %arg2 : i32, i32, i32
  }
  func.func @transform_1(%arg0: i32, %arg1: i32, %arg2: i32) -> (i32, i32) {
    %c0_i32 = arith.constant 0 : i32
    %c0_i32_0 = arith.constant 0 : i32
    return %arg2, %c0_i32 : i32, i32
  }
  func.func @transform_2(%arg0: i32, %arg1: i32, %arg2: i32) -> (i32, i32) {
    %c0_i32 = arith.constant 0 : i32
    %c0_i32_0 = arith.constant 0 : i32
    %c0_i32_1 = arith.constant 0 : i32
    return %c0_i32, %c0_i32_0 : i32, i32
  }
  func.func @transform_3(%arg0: i32, %arg1: i32, %arg2: i32) -> (i32, i32, i32) {
    %c0_i32 = arith.constant 0 : i32
    %c0_i32_0 = arith.constant 0 : i32
    return %arg0, %arg1, %c0_i32 : i32, i32, i32
  }
}

</mosaic_0001>

<llo_original>
// kernel: discriminator_forward.4
$region0: #{discriminator_forward.4}
  #allocation0 [shape = 'u32[]', space=smem, size = 0x4, offset = 0x4, fixed_abs, tag = 'smem constant byte address 0x4 - core index']
  #allocation1 [shape = 'u32[144,128]{1,0:T(1,128)}', space=vmem, size = 0x12000, scoped, tag = 'internal scratch']
  #allocation2 [shape = 'f32[64,128]{1,0:T(8,128)}', space=vmem, size = 0x8000, scoped, tag = 'scratch operand']
  %s0 = inlined_call_operand.vmem [shape: bf16[2,64,128], index: 0, kind: input, shape index: {}]
  %s1 = inlined_call_operand.vmem [shape: bf16[128,128], index: 1, kind: input, shape index: {}]
  %s2 = inlined_call_operand.vmem [shape: f32[1,128], index: 2, kind: input, shape index: {}]
  %s3 = inlined_call_operand.vmem [shape: bf16[2,64,128], index: 3, kind: output, shape index: {}]
  %s4 = sld [smem:[#allocation0]]
  $region53: #{discriminator_forward.4} parent=0
    _
  %s6 = ssub.s32 1, %s4
  %s7 = scalar_select 0, %s6, %s4
  loop: start=0, step=1, limit=4
  $region2: #{discriminator_forward.4} parent=0 // loop_pre_header
    _
  $region3: #{discriminator_forward.4} parent=0 // loop_header
    %s9 = sphi 0, %s13
    %p10 = scmp.ge.s32.totalorder %s9, 4
    %s16 = sphi 0, %s35
    %s17 = sphi 0, %s31
    %s18 = sphi 0, %s27
    %s19 = sphi 0, %s16
    %s20 = sphi 0, %s17
    %s21 = sphi 0, %s18
    %s22 = sphi 0, %s19
    %s23 = sphi 0, %s20
    %s24 = sphi 0, %s21
    %s42 = sphi 0, %s44
    %s45 = sphi 0, %s42
    %s46 = sphi 0, %s45
    %s62 = sphi 0, %s46
    %s68 = sphi 0, %s70
    %s71 = sphi 0, %s68
    %s72 = sphi 0, %s71
    %s88 = sphi 0, %s72
    %s92 = sphi 0, %s92
    %s94 = sphi 0, %s92
    %s95 = sphi 0, %s94
    %s109 = sphi 0, %s95
    %s117 = sphi 0, %s119
    %s120 = sphi 0, %s117
    %s121 = sphi 0, %s120
    %s137 = sphi 0, %s121
  $region4: #{discriminator_forward.4} parent=0 // loop_header_branch
    %12 = sbr.rel (%p10) target = $region8
  $region5: #{discriminator_forward.4} parent=0 // loop_body
    %s14 = ssub.s32 %s9, 1
    %s15 = ssub.s32 %s9, 2
    %s25 = sadd.s32 1, %s18
    %p26 = scmp.ge.s32.totalorder %s25, 1
    %s27 = scalar_select %p26, 0, %s25
    %s28 = sadd.s32 1, %s17
    %s29 = scalar_select %p26, %s28, %s17
    %p30 = scmp.ge.s32.totalorder %s29, 1
    %s31 = scalar_select %p30, 0, %s29
    %s32 = sadd.s32 1, %s16
    %s33 = scalar_select %p30, %s32, %s16
    %p34 = scmp.ge.s32.totalorder %s33, 2
    %s35 = scalar_select %p34, 0, %s33
    %s36 = ssub.s32 %s16, %s35
    %s37 = ssub.s32 %s17, %s31
    %s38 = sor.u32 %s36, %s37
    %s39 = ssub.s32 %s18, %s27
    %s40 = sor.u32 %s38, %s39
    %p41 = scmp.eq.s32.totalorder %s40, 0
    %s43 = sadd.s32 %s42, 1
    %s44 = scalar_select %p41, %s42, %s43
    %p47 = pneg %p41
    %p48 = scmp.eq.s32.totalorder %s9, 1
    %p49 = por %p47, %p48
    %p50 = scmp.ne.s32.totalorder %s42, %s45
    %p51 = scmp.eq.s32.totalorder %s9, 0
    %p52 = por %p50, %p51
    %p53 = scmp.ne.s32.totalorder %s42, %s45
    %p54 = scmp.eq.s32.totalorder %s14, 1
    %p55 = por %p53, %p54
    %p56 = scmp.ne.s32.totalorder %s45, %s46
    %p57 = scmp.eq.s32.totalorder %s14, 0
    %p58 = por %p56, %p57
    %p59 = scmp.ne.s32.totalorder %s45, %s46
    %p60 = scmp.eq.s32.totalorder %s15, 1
    %p61 = por %p59, %p60
    %p63 = scmp.ne.s32.totalorder %s46, %s62
    %p64 = scmp.eq.s32.totalorder %s15, 0
    %p65 = por %p63, %p64
    %s66 = ssub.s32 %s18, %s27
    %p67 = scmp.eq.s32.totalorder %s66, 0
    %s69 = sadd.s32 %s68, 1
    %s70 = scalar_select %p67, %s68, %s69
    %p73 = pneg %p67
    %p74 = scmp.eq.s32.totalorder %s9, 1
    %p75 = por %p73, %p74
    %p76 = scmp.ne.s32.totalorder %s68, %s71
    %p77 = scmp.eq.s32.totalorder %s9, 0
    %p78 = por %p76, %p77
    %p79 = scmp.ne.s32.totalorder %s68, %s71
    %p80 = scmp.eq.s32.totalorder %s14, 1
    %p81 = por %p79, %p80
    %p82 = scmp.ne.s32.totalorder %s71, %s72
    %p83 = scmp.eq.s32.totalorder %s14, 0
    %p84 = por %p82, %p83
    %p85 = scmp.ne.s32.totalorder %s71, %s72
    %p86 = scmp.eq.s32.totalorder %s15, 1
    %p87 = por %p85, %p86
    %p89 = scmp.ne.s32.totalorder %s72, %s88
    %p90 = scmp.eq.s32.totalorder %s15, 0
    %p91 = por %p89, %p90
    %s93 = sadd.s32 %s92, 1
    %p96 = scmp.eq.s32.totalorder %s9, 1
    %p97 = scmp.ne.s32.totalorder %s92, %s94
    %p98 = scmp.eq.s32.totalorder %s9, 0
    %p99 = por %p97, %p98
    %p100 = scmp.ne.s32.totalorder %s92, %s94
    %p101 = scmp.eq.s32.totalorder %s14, 1
    %p102 = por %p100, %p101
    %p103 = scmp.ne.s32.totalorder %s94, %s95
    %p104 = scmp.eq.s32.totalorder %s14, 0
    %p105 = por %p103, %p104
    %p106 = scmp.ne.s32.totalorder %s94, %s95
    %p107 = scmp.eq.s32.totalorder %s15, 1
    %p108 = por %p106, %p107
    %p110 = scmp.ne.s32.totalorder %s95, %s109
    %p111 = scmp.eq.s32.totalorder %s15, 0
    %p112 = por %p110, %p111
    %s113 = ssub.s32 %s16, %s35
    %s114 = ssub.s32 %s17, %s31
    %s115 = sor.u32 %s113, %s114
    %p116 = scmp.eq.s32.totalorder %s115, 0
    %s118 = sadd.s32 %s117, 1
    %s119 = scalar_select %p116, %s117, %s118
    %p122 = pneg %p116
    %p123 = scmp.eq.s32.totalorder %s9, 1
    %p124 = por %p122, %p123
    %p125 = scmp.ne.s32.totalorder %s117, %s120
    %p126 = scmp.eq.s32.totalorder %s9, 0
    %p127 = por %p125, %p126
    %p128 = scmp.ne.s32.totalorder %s117, %s120
    %p129 = scmp.eq.s32.totalorder %s14, 1
    %p130 = por %p128, %p129
    %p131 = scmp.ne.s32.totalorder %s120, %s121
    %p132 = scmp.eq.s32.totalorder %s14, 0
    %p133 = por %p131, %p132
    %p134 = scmp.ne.s32.totalorder %s120, %s121
    %p135 = scmp.eq.s32.totalorder %s15, 1
    %p136 = por %p134, %p135
    %p138 = scmp.ne.s32.totalorder %s121, %s137
    %p139 = scmp.eq.s32.totalorder %s15, 0
    %p140 = por %p138, %p139
    %p141 = scmp.le.s32.totalorder 1, %s9
    %p142 = scmp.lt.s32.totalorder %s9, 3
    %p143 = pnand %p141, %p142
    %p144 = pneg %p143
    // Predicated region
    $region9: #{discriminator_forward.4} parent=5 // pred_check
      _
    $region10: #{discriminator_forward.4} parent=5 // pred_check_branch
      %146 = sbr.rel (%p143) target = $region12
    $region11: #{discriminator_forward.4} parent=5 // pred_region
      %s147 = ssub.s32 %s9, 1
      // Predicated region
      $region13: #{discriminator_forward.4} parent=11 // pred_check
        %p148 = pneg %p84
      $region14: #{discriminator_forward.4} parent=11 // pred_check_branch
        %150 = sbr.rel (%p148) target = $region16
      $region15: #{discriminator_forward.4} parent=11 // pred_region
        %s151 = smul.u32 16, %s21
        %p152 = scmp.lt.s32.totalorder %s151, 15
        %s153 = scalar_select %p152, %s151, 15
        %s154 = smul.addr %s153, 4
        %s155 = scalar_lea.vmem %s1, %s154
        %s156 = smul.u32 16, %s21
      $region16: #{discriminator_forward.4} parent=11 // pred_fallthru
        _
      // Predicated region
      $region17: #{discriminator_forward.4} parent=11 // pred_check
        %p157 = pneg %p105
      $region18: #{discriminator_forward.4} parent=11 // pred_check_branch
        %159 = sbr.rel (%p157) target = $region20
      $region19: #{discriminator_forward.4} parent=11 // pred_region
        _
      $region20: #{discriminator_forward.4} parent=11 // pred_fallthru
        _
    $region12: #{discriminator_forward.4} parent=5 // pred_fallthru
      _
    %p160 = scmp.lt.s32.totalorder %s9, 2
    // Predicated region
    $region21: #{discriminator_forward.4} parent=5 // pred_check
      %p161 = pneg %p160
    $region22: #{discriminator_forward.4} parent=5 // pred_check_branch
      %163 = sbr.rel (%p161) target = $region24
    $region23: #{discriminator_forward.4} parent=5 // pred_region
      // Predicated region
      $region25: #{discriminator_forward.4} parent=23 // pred_check
        %p164 = pneg %p52
      $region26: #{discriminator_forward.4} parent=23 // pred_check_branch
        %166 = sbr.rel (%p164) target = $region28
      $region27: #{discriminator_forward.4} parent=23 // pred_region
        %s167 = smul.u32 8, %s17
        %p168 = scmp.lt.s32.totalorder %s16, 1
        %s169 = scalar_select %p168, %s16, 1
        %p170 = scmp.lt.s32.totalorder %s167, 7
        %s171 = scalar_select %p170, %s167, 7
        %p172 = scmp.lt.s32.totalorder %s18, 0
        %s173 = scalar_select %p172, %s18, 0
        %s174 = sadd.s32 %s173, %s171
        %s175 = smul.addr %s169, 8
        %s176 = sadd.s32 %s174, %s175
        %s177 = smul.addr %s176, 4
        %s178 = scalar_lea.vmem %s0, %s177
        %s179 = smul.u32 8, %s17
      $region28: #{discriminator_forward.4} parent=23 // pred_fallthru
        _
    $region24: #{discriminator_forward.4} parent=5 // pred_fallthru
      _
    %p180 = scmp.le.s32.totalorder 1, %s9
    %p181 = scmp.lt.s32.totalorder %s9, 3
    %p182 = pnand %p180, %p181
    %p183 = pneg %p182
    // Predicated region
    $region29: #{discriminator_forward.4} parent=5 // pred_check
      _
    $region30: #{discriminator_forward.4} parent=5 // pred_check_branch
      %185 = sbr.rel (%p182) target = $region32
    $region31: #{discriminator_forward.4} parent=5 // pred_region
      %s186 = ssub.s32 %s9, 1
      %s187 = smul.u32 8, %s20
      %p188 = scmp.lt.s32.totalorder %s19, 1
      %s189 = scalar_select %p188, %s19, 1
      %p190 = scmp.lt.s32.totalorder %s187, 7
      %s191 = scalar_select %p190, %s187, 7
      %p192 = scmp.lt.s32.totalorder %s21, 0
      %s193 = scalar_select %p192, %s21, 0
      %s194 = sadd.s32 %s193, %s191
      %s195 = smul.addr %s189, 8
      %s196 = sadd.s32 %s194, %s195
      %s197 = smul.addr %s196, 4
      %s198 = scalar_lea.vmem %s0, %s197
      %p199 = pneg %p58
      %p200 = pneg %p55
      %s201 = smul.u32 16, %s21
      %p202 = scmp.lt.s32.totalorder %s201, 15
      %s203 = scalar_select %p202, %s201, 15
      %s204 = smul.addr %s203, 4
      %s205 = scalar_lea.vmem %s1, %s204
      %p206 = pneg %p84
      %p207 = pneg %p81
      %p208 = pneg %p105
      %p209 = pneg %p102
      %p210 = pneg %p133
      %p211 = pneg %p130
      %s212 = smul.u32 8, %s20
      %p213 = scmp.lt.s32.totalorder %s19, 1
      %s214 = scalar_select %p213, %s19, 1
      %p215 = scmp.lt.s32.totalorder %s212, 7
      %s216 = scalar_select %p215, %s212, 7
      %s217 = smul.addr %s214, 8
      %s218 = sadd.s32 %s216, %s217
      %s219 = smul.addr %s218, 4
      %s220 = scalar_lea.vmem %s3, %s219
      %s221 = smul.u32 8, %s20
      %p222 = scmp.lt.s32.totalorder %s19, 1
      %s223 = scalar_select %p222, %s19, 1
      %p224 = scmp.lt.s32.totalorder %s221, 7
      %s225 = scalar_select %p224, %s221, 7
      %p226 = scmp.lt.s32.totalorder %s21, 0
      %s227 = scalar_select %p226, %s21, 0
      %s228 = sadd.s32 %s227, %s225
      %s229 = smul.addr %s223, 8
      %s230 = sadd.s32 %s228, %s229
      %s231 = smul.addr %s230, 4
      %s232 = scalar_lea.vmem %s0, %s231
      %s233 = smul.u32 8, %s20
      %s234 = smul.u32 16, %s21
      %p235 = scmp.lt.s32.totalorder %s234, 15
      %s236 = scalar_select %p235, %s234, 15
      %s237 = smul.addr %s236, 4
      %s238 = scalar_lea.vmem %s1, %s237
      %s239 = smul.u32 16, %s21
      %s240 = smul.u32 8, %s20
      %p241 = scmp.lt.s32.totalorder %s19, 1
      %s242 = scalar_select %p241, %s19, 1
      %p243 = scmp.lt.s32.totalorder %s240, 7
      %s244 = scalar_select %p243, %s240, 7
      %s245 = smul.addr %s242, 8
      %s246 = sadd.s32 %s244, %s245
      %s247 = smul.addr %s246, 4
      %s248 = scalar_lea.vmem %s3, %s247
      %s249 = smul.u32 8, %s20
      %p251 = scmp.eq.s32.totalorder %s21, 0
      // Predicated region
      $region33: #{discriminator_forward.4} parent=31 // pred_check
        %p252 = pneg %p251
      $region34: #{discriminator_forward.4} parent=31 // pred_check_branch
        %254 = sbr.rel (%p252) target = $region36
      $region35: #{discriminator_forward.4} parent=31 // pred_region
        %255 = vst [vmem:[#allocation2] sm:$0xff] 0.0
        %256 = vst [vmem:[#allocation2 + $0x8] sm:$0xff] 0.0
        %257 = vst [vmem:[#allocation2 + $0x10] sm:$0xff] 0.0
        %258 = vst [vmem:[#allocation2 + $0x18] sm:$0xff] 0.0
        %259 = vst [vmem:[#allocation2 + $0x20] sm:$0xff] 0.0
        %260 = vst [vmem:[#allocation2 + $0x28] sm:$0xff] 0.0
        %261 = vst [vmem:[#allocation2 + $0x30] sm:$0xff] 0.0
        %262 = vst [vmem:[#allocation2 + $0x38] sm:$0xff] 0.0
      $region36: #{discriminator_forward.4} parent=31 // pred_fallthru
        _
      %v263 = vld [vmem:[#allocation2] sm:$0xff]
      %v264 = vld [vmem:[#allocation2 + $0x8] sm:$0xff]
      %v265 = vld [vmem:[#allocation2 + $0x10] sm:$0xff]
      %v266 = vld [vmem:[#allocation2 + $0x18] sm:$0xff]
      %v267 = vld [vmem:[#allocation2 + $0x20] sm:$0xff]
      %v268 = vld [vmem:[#allocation2 + $0x28] sm:$0xff]
      %v269 = vld [vmem:[#allocation2 + $0x30] sm:$0xff]
      %v270 = vld [vmem:[#allocation2 + $0x38] sm:$0xff]
      %v271 = vld [vmem:[%s232] sm:$0xf]
      %v272 = vld [vmem:[%s232 + $0x4] sm:$0xf]
      %v273 = vld [vmem:[%s232 + $0x8] sm:$0xf]
      %v274 = vld [vmem:[%s232 + $0xc] sm:$0xf]
      %v275 = vld [vmem:[%s232 + $0x10] sm:$0xf]
      %v276 = vld [vmem:[%s232 + $0x14] sm:$0xf]
      %v277 = vld [vmem:[%s232 + $0x18] sm:$0xf]
      %v278 = vld [vmem:[%s232 + $0x1c] sm:$0xf]
      %v279 = vld [vmem:[%s238] sm:$0xf]
      %v280 = vld [vmem:[%s238 + $0x4] sm:$0xf]
      %v281 = vld [vmem:[%s238 + $0x8] sm:$0xf]
      %v282 = vld [vmem:[%s238 + $0xc] sm:$0xf]
      %v283 = vld [vmem:[%s238 + $0x10] sm:$0xf]
      %v284 = vld [vmem:[%s238 + $0x14] sm:$0xf]
      %v285 = vld [vmem:[%s238 + $0x18] sm:$0xf]
      %v286 = vld [vmem:[%s238 + $0x1c] sm:$0xf]
      %v287 = vld [vmem:[%s238 + $0x20] sm:$0xf]
      %v288 = vld [vmem:[%s238 + $0x24] sm:$0xf]
      %v289 = vld [vmem:[%s238 + $0x28] sm:$0xf]
      %v290 = vld [vmem:[%s238 + $0x2c] sm:$0xf]
      %v291 = vld [vmem:[%s238 + $0x30] sm:$0xf]
      %v292 = vld [vmem:[%s238 + $0x34] sm:$0xf]
      %v293 = vld [vmem:[%s238 + $0x38] sm:$0xf]
      %v294 = vld [vmem:[%s238 + $0x3c] sm:$0xf]
      %v303 = vunpack.c.l.b16 %v271
      %v304 = vunpack.c.l.b16 %v272
      %v305 = vunpack.c.l.b16 %v273
      %v306 = vunpack.c.l.b16 %v274
      %v307 = vunpack.c.l.b16 %v275
      %v308 = vunpack.c.l.b16 %v276
      %v309 = vunpack.c.l.b16 %v277
      %v310 = vunpack.c.l.b16 %v278
      %v311 = vpack.c.b16 %v304, %v303
      %v312 = vpack.c.b16 %v306, %v305
      %v313 = vpack.c.b16 %v308, %v307
      %v314 = vpack.c.b16 %v310, %v309
      %v335 = vunpack.c.l.b16 %v279
      %v336 = vunpack.c.l.b16 %v280
      %v337 = vunpack.c.l.b16 %v281
      %v338 = vunpack.c.l.b16 %v282
      %v339 = vunpack.c.l.b16 %v283
      %v340 = vunpack.c.l.b16 %v284
      %v341 = vunpack.c.l.b16 %v285
      %v342 = vunpack.c.l.b16 %v286
      %v343 = vunpack.c.l.b16 %v287
      %v344 = vunpack.c.l.b16 %v288
      %v345 = vunpack.c.l.b16 %v289
      %v346 = vunpack.c.l.b16 %v290
      %v347 = vunpack.c.l.b16 %v291
      %v348 = vunpack.c.l.b16 %v292
      %v349 = vunpack.c.l.b16 %v293
      %v350 = vunpack.c.l.b16 %v294
      %v351 = vpack.c.b16 %v336, %v335
      %v352 = vpack.c.b16 %v338, %v337
      %v353 = vpack.c.b16 %v340, %v339
      %v354 = vpack.c.b16 %v342, %v341
      %v355 = vpack.c.b16 %v344, %v343
      %v356 = vpack.c.b16 %v346, %v345
      %v357 = vpack.c.b16 %v348, %v347
      %v358 = vpack.c.b16 %v350, %v349
      %367 = vmatprep.subr.bf16.mxu0 0
      %368 = vmatpush1.bf16.msra.mxu0 %v351
      %369 = vmatprep.subr.bf16.mxu0 0
      %370 = vmatpush1.bf16.msra.mxu0 %v352
      %371 = vmatprep.subr.bf16.mxu0 0
      %372 = vmatpush1.bf16.msra.mxu0 %v353
      %373 = vmatprep.subr.bf16.mxu0 0
      %374 = vmatpush1.bf16.msra.mxu0 %v354
      %375 = vmatprep.subr.bf16.mxu0 0
      %376 = vmatpush1.bf16.msra.mxu0 %v355
      %377 = vmatprep.subr.bf16.mxu0 0
      %378 = vmatpush1.bf16.msra.mxu0 %v356
      %379 = vmatprep.subr.bf16.mxu0 0
      %380 = vmatpush1.bf16.msra.mxu0 %v357
      %381 = vmatprep.subr.bf16.mxu0 0
      %382 = vmatpush1.bf16.msra.mxu0 %v358
      %383 = vmatprep.subr.bf16.mxu0 0
      %384 = vmatpush1.bf16.msra.mxu0 0
      %385 = vmatprep.subr.bf16.mxu0 0
      %386 = vmatpush1.bf16.msra.mxu0 0
      %387 = vmatprep.subr.bf16.mxu0 0
      %388 = vmatpush1.bf16.msra.mxu0 0
      %389 = vmatprep.subr.bf16.mxu0 0
      %390 = vmatpush1.bf16.msra.mxu0 0
      %391 = vmatprep.subr.bf16.mxu0 0
      %392 = vmatpush1.bf16.msra.mxu0 0
      %393 = vmatprep.subr.bf16.mxu0 0
      %394 = vmatpush1.bf16.msra.mxu0 0
      %395 = vmatprep.subr.bf16.mxu0 0
      %396 = vmatpush1.bf16.msra.mxu0 0
      %397 = vmatprep.subr.bf16.mxu0 0
      %398 = vmatpush1.bf16.msra.mxu0 0
      %399 = vmatprep.mubr.bf16.mxu0 0
      %400 = vmatmul.mubr.bf16.gmra.mrb[0].mxu0 %v311
      %v401 = vpop.f32.mrb[0].mxu0
      %v402 = vadd.f32 0.0, %v401
      %v403 = vpop.f32.mrb[0].mxu0
      %v404 = vpop.f32.mrb[0].mxu0
      %v405 = vadd.f32 0.0, %v404
      %v406 = vpop.f32.mrb[0].mxu0
      %407 = vmatprep.mubr.bf16.mxu0 0
      %408 = vmatmul.mubr.bf16.gmra.mrb[0].mxu0 %v312
      %v409 = vpop.f32.mrb[0].mxu0
      %v410 = vadd.f32 0.0, %v409
      %v411 = vpop.f32.mrb[0].mxu0
      %v412 = vpop.f32.mrb[0].mxu0
      %v413 = vadd.f32 0.0, %v412
      %v414 = vpop.f32.mrb[0].mxu0
      %415 = vmatprep.mubr.bf16.mxu0 0
      %416 = vmatmul.mubr.bf16.gmra.mrb[0].mxu0 %v313
      %v417 = vpop.f32.mrb[0].mxu0
      %v418 = vadd.f32 0.0, %v417
      %v419 = vpop.f32.mrb[0].mxu0
      %v420 = vpop.f32.mrb[0].mxu0
      %v421 = vadd.f32 0.0, %v420
      %v422 = vpop.f32.mrb[0].mxu0
      %423 = vmatprep.mubr.bf16.mxu0 0
      %424 = vmatmul.mubr.bf16.gmra.mrb[0].mxu0 %v314
      %v425 = vpop.f32.mrb[0].mxu0
      %v426 = vadd.f32 0.0, %v425
      %v427 = vpop.f32.mrb[0].mxu0
      %v428 = vpop.f32.mrb[0].mxu0
      %v429 = vadd.f32 0.0, %v428
      %v430 = vpop.f32.mrb[0].mxu0
      %431 = vdwg.mxu0
      %v432 = vadd.f32 %v263, %v402
      %v433 = vadd.f32 %v264, %v405
      %v434 = vadd.f32 %v265, %v410
      %v435 = vadd.f32 %v266, %v413
      %v436 = vadd.f32 %v267, %v418
      %v437 = vadd.f32 %v268, %v421
      %v438 = vadd.f32 %v269, %v426
      %v439 = vadd.f32 %v270, %v429
      %440 = vst [vmem:[#allocation2] sm:$0xff] %v432
      %441 = vst [vmem:[#allocation2 + $0x8] sm:$0xff] %v433
      %442 = vst [vmem:[#allocation2 + $0x10] sm:$0xff] %v434
      %443 = vst [vmem:[#allocation2 + $0x18] sm:$0xff] %v435
      %444 = vst [vmem:[#allocation2 + $0x20] sm:$0xff] %v436
      %445 = vst [vmem:[#allocation2 + $0x28] sm:$0xff] %v437
      %446 = vst [vmem:[#allocation2 + $0x30] sm:$0xff] %v438
      %447 = vst [vmem:[#allocation2 + $0x38] sm:$0xff] %v439
      // Predicated region
      $region37: #{discriminator_forward.4} parent=31 // pred_check
        %p448 = pneg %p251
      $region38: #{discriminator_forward.4} parent=31 // pred_check_branch
        %450 = sbr.rel (%p448) target = $region40
      $region39: #{discriminator_forward.4} parent=31 // pred_region
        %v451 = vld [vmem:[#allocation2] sm:$0xff]
        %v452 = vld [vmem:[#allocation2 + $0x8] sm:$0xff]
        %v453 = vld [vmem:[#allocation2 + $0x10] sm:$0xff]
        %v454 = vld [vmem:[#allocation2 + $0x18] sm:$0xff]
        %v455 = vld [vmem:[#allocation2 + $0x20] sm:$0xff]
        %v456 = vld [vmem:[#allocation2 + $0x28] sm:$0xff]
        %v457 = vld [vmem:[#allocation2 + $0x30] sm:$0xff]
        %v458 = vld [vmem:[#allocation2 + $0x38] sm:$0xff]
        %v459 = vld [vmem:[%s2] sm:$0x1]
        %v461 = vlaneseq
        %v462 = vshrl.u32 %v461, 7
        %v463 = vsub.s32 0, %v462
        %v464 = vrot.slane %v459, %v463
        %v466 = vadd.f32 %v451, %v464
        %v467 = vadd.f32 %v452, %v464
        %v468 = vadd.f32 %v453, %v464
        %v469 = vadd.f32 %v454, %v464
        %v470 = vadd.f32 %v455, %v464
        %v471 = vadd.f32 %v456, %v464
        %v472 = vadd.f32 %v457, %v464
        %v473 = vadd.f32 %v458, %v464
        %v474 = vmul.f32 %v466, 0.01
        %v475 = vmul.f32 %v467, 0.01
        %v476 = vmul.f32 %v468, 0.01
        %v477 = vmul.f32 %v469, 0.01
        %v478 = vmul.f32 %v470, 0.01
        %v479 = vmul.f32 %v471, 0.01
        %v480 = vmul.f32 %v472, 0.01
        %v481 = vmul.f32 %v473, 0.01
        %v482 = vmax.f32 %v466, %v474
        %v483 = vmax.f32 %v467, %v475
        %v484 = vmax.f32 %v468, %v476
        %v485 = vmax.f32 %v469, %v477
        %v486 = vmax.f32 %v470, %v478
        %v487 = vmax.f32 %v471, %v479
        %v488 = vmax.f32 %v472, %v480
        %v489 = vmax.f32 %v473, %v481
        %v490 = vpack.c.bf16 %v483, %v482
        %v491 = vpack.c.bf16 %v485, %v484
        %v492 = vpack.c.bf16 %v487, %v486
        %v493 = vpack.c.bf16 %v489, %v488
        %v498 = vunpack.c.l.b16 %v490
        %v499 = vunpack.c.h.b16 %v490
        %v500 = vunpack.c.l.b16 %v491
        %v501 = vunpack.c.h.b16 %v491
        %v502 = vunpack.c.l.b16 %v492
        %v503 = vunpack.c.h.b16 %v492
        %v504 = vunpack.c.l.b16 %v493
        %v505 = vunpack.c.h.b16 %v493
        %v506 = vpack.c.b16 %v498, %v498
        %v507 = vpack.c.b16 %v499, %v499
        %v508 = vpack.c.b16 %v500, %v500
        %v509 = vpack.c.b16 %v501, %v501
        %v510 = vpack.c.b16 %v502, %v502
        %v511 = vpack.c.b16 %v503, %v503
        %v512 = vpack.c.b16 %v504, %v504
        %v513 = vpack.c.b16 %v505, %v505
        %522 = vst [vmem:[%s248] sm:$0xf] %v506
        %523 = vst [vmem:[%s248 + $0x4] sm:$0xf] %v507
        %524 = vst [vmem:[%s248 + $0x8] sm:$0xf] %v508
        %525 = vst [vmem:[%s248 + $0xc] sm:$0xf] %v509
        %526 = vst [vmem:[%s248 + $0x10] sm:$0xf] %v510
        %527 = vst [vmem:[%s248 + $0x14] sm:$0xf] %v511
        %528 = vst [vmem:[%s248 + $0x18] sm:$0xf] %v512
        %529 = vst [vmem:[%s248 + $0x1c] sm:$0xf] %v513
      $region40: #{discriminator_forward.4} parent=31 // pred_fallthru
        _
      %s530 = smul.u32 8, %s20
      %p531 = scmp.lt.s32.totalorder %s19, 1
      %s532 = scalar_select %p531, %s19, 1
      %p533 = scmp.lt.s32.totalorder %s530, 7
      %s534 = scalar_select %p533, %s530, 7
      %s535 = smul.addr %s532, 8
      %s536 = sadd.s32 %s534, %s535
      %s537 = smul.addr %s536, 4
      %s538 = scalar_lea.vmem %s3, %s537
      // Predicated region
      $region41: #{discriminator_forward.4} parent=31 // pred_check
        %p539 = pneg %p130
      $region42: #{discriminator_forward.4} parent=31 // pred_check_branch
        %541 = sbr.rel (%p539) target = $region44
      $region43: #{discriminator_forward.4} parent=31 // pred_region
        %s542 = smul.u32 8, %s20
      $region44: #{discriminator_forward.4} parent=31 // pred_fallthru
        _
    $region32: #{discriminator_forward.4} parent=5 // pred_fallthru
      _
    %p543 = scmp.le.s32.totalorder 2, %s9
    // Predicated region
    $region45: #{discriminator_forward.4} parent=5 // pred_check
      %p544 = pneg %p543
    $region46: #{discriminator_forward.4} parent=5 // pred_check_branch
      %546 = sbr.rel (%p544) target = $region48
    $region47: #{discriminator_forward.4} parent=5 // pred_region
      %s547 = ssub.s32 %s9, 2
      // Predicated region
      $region49: #{discriminator_forward.4} parent=47 // pred_check
        %p548 = pneg %p136
      $region50: #{discriminator_forward.4} parent=47 // pred_check_branch
        %550 = sbr.rel (%p548) target = $region52
      $region51: #{discriminator_forward.4} parent=47 // pred_region
        %s551 = smul.u32 8, %s23
        %p552 = scmp.lt.s32.totalorder %s22, 1
        %s553 = scalar_select %p552, %s22, 1
        %p554 = scmp.lt.s32.totalorder %s551, 7
        %s555 = scalar_select %p554, %s551, 7
        %s556 = smul.addr %s553, 8
        %s557 = sadd.s32 %s555, %s556
        %s558 = smul.addr %s557, 4
        %s559 = scalar_lea.vmem %s3, %s558
      $region52: #{discriminator_forward.4} parent=47 // pred_fallthru
        _
    $region48: #{discriminator_forward.4} parent=5 // pred_fallthru
      _
  $region6: #{discriminator_forward.4} parent=0 // loop_footer
    %s13 = sadd.s32 1, %s9
  $region7: #{discriminator_forward.4} parent=0 // loop_footer_branch
    %8 = sbr.rel target = $region3
  $region8: #{discriminator_forward.4} parent=0 // loop_exit
    _

// kernel: discriminator_forward.5
$region0: #{discriminator_forward.5}
  #allocation0 [shape = 'u32[]', space=smem, size = 0x4, offset = 0x4, fixed_abs, tag = 'smem constant byte address 0x4 - core index']
  #allocation1 [shape = 'u32[144,128]{1,0:T(1,128)}', space=vmem, size = 0x12000, scoped, tag = 'internal scratch']
  #allocation2 [shape = 'f32[16,128]{1,0:T(8,128)}', space=vmem, size = 0x2000, scoped, tag = 'scratch operand']
  %s0 = inlined_call_operand.vmem [shape: bf16[2,16,128], index: 0, kind: input, shape index: {}]
  %s1 = inlined_call_operand.vmem [shape: bf16[128,128], index: 1, kind: input, shape index: {}]
  %s2 = inlined_call_operand.vmem [shape: f32[1,128], index: 2, kind: input, shape index: {}]
  %s3 = inlined_call_operand.vmem [shape: bf16[2,16,128], index: 3, kind: output, shape index: {}]
  %s4 = sld [smem:[#allocation0]]
  $region53: #{discriminator_forward.5} parent=0
    _
  %s6 = ssub.s32 1, %s4
  %s7 = scalar_select 0, %s6, %s4
  loop: start=0, step=1, limit=4
  $region2: #{discriminator_forward.5} parent=0 // loop_pre_header
    _
  $region3: #{discriminator_forward.5} parent=0 // loop_header
    %s9 = sphi 0, %s13
    %p10 = scmp.ge.s32.totalorder %s9, 4
    %s16 = sphi 0, %s35
    %s17 = sphi 0, %s31
    %s18 = sphi 0, %s27
    %s19 = sphi 0, %s16
    %s20 = sphi 0, %s17
    %s21 = sphi 0, %s18
    %s22 = sphi 0, %s19
    %s23 = sphi 0, %s20
    %s24 = sphi 0, %s21
    %s42 = sphi 0, %s44
    %s45 = sphi 0, %s42
    %s46 = sphi 0, %s45
    %s62 = sphi 0, %s46
    %s68 = sphi 0, %s70
    %s71 = sphi 0, %s68
    %s72 = sphi 0, %s71
    %s88 = sphi 0, %s72
    %s92 = sphi 0, %s92
    %s94 = sphi 0, %s92
    %s95 = sphi 0, %s94
    %s109 = sphi 0, %s95
    %s117 = sphi 0, %s119
    %s120 = sphi 0, %s117
    %s121 = sphi 0, %s120
    %s137 = sphi 0, %s121
  $region4: #{discriminator_forward.5} parent=0 // loop_header_branch
    %12 = sbr.rel (%p10) target = $region8
  $region5: #{discriminator_forward.5} parent=0 // loop_body
    %s14 = ssub.s32 %s9, 1
    %s15 = ssub.s32 %s9, 2
    %s25 = sadd.s32 1, %s18
    %p26 = scmp.ge.s32.totalorder %s25, 1
    %s27 = scalar_select %p26, 0, %s25
    %s28 = sadd.s32 1, %s17
    %s29 = scalar_select %p26, %s28, %s17
    %p30 = scmp.ge.s32.totalorder %s29, 1
    %s31 = scalar_select %p30, 0, %s29
    %s32 = sadd.s32 1, %s16
    %s33 = scalar_select %p30, %s32, %s16
    %p34 = scmp.ge.s32.totalorder %s33, 2
    %s35 = scalar_select %p34, 0, %s33
    %s36 = ssub.s32 %s16, %s35
    %s37 = ssub.s32 %s17, %s31
    %s38 = sor.u32 %s36, %s37
    %s39 = ssub.s32 %s18, %s27
    %s40 = sor.u32 %s38, %s39
    %p41 = scmp.eq.s32.totalorder %s40, 0
    %s43 = sadd.s32 %s42, 1
    %s44 = scalar_select %p41, %s42, %s43
    %p47 = pneg %p41
    %p48 = scmp.eq.s32.totalorder %s9, 1
    %p49 = por %p47, %p48
    %p50 = scmp.ne.s32.totalorder %s42, %s45
    %p51 = scmp.eq.s32.totalorder %s9, 0
    %p52 = por %p50, %p51
    %p53 = scmp.ne.s32.totalorder %s42, %s45
    %p54 = scmp.eq.s32.totalorder %s14, 1
    %p55 = por %p53, %p54
    %p56 = scmp.ne.s32.totalorder %s45, %s46
    %p57 = scmp.eq.s32.totalorder %s14, 0
    %p58 = por %p56, %p57
    %p59 = scmp.ne.s32.totalorder %s45, %s46
    %p60 = scmp.eq.s32.totalorder %s15, 1
    %p61 = por %p59, %p60
    %p63 = scmp.ne.s32.totalorder %s46, %s62
    %p64 = scmp.eq.s32.totalorder %s15, 0
    %p65 = por %p63, %p64
    %s66 = ssub.s32 %s18, %s27
    %p67 = scmp.eq.s32.totalorder %s66, 0
    %s69 = sadd.s32 %s68, 1
    %s70 = scalar_select %p67, %s68, %s69
    %p73 = pneg %p67
    %p74 = scmp.eq.s32.totalorder %s9, 1
    %p75 = por %p73, %p74
    %p76 = scmp.ne.s32.totalorder %s68, %s71
    %p77 = scmp.eq.s32.totalorder %s9, 0
    %p78 = por %p76, %p77
    %p79 = scmp.ne.s32.totalorder %s68, %s71
    %p80 = scmp.eq.s32.totalorder %s14, 1
    %p81 = por %p79, %p80
    %p82 = scmp.ne.s32.totalorder %s71, %s72
    %p83 = scmp.eq.s32.totalorder %s14, 0
    %p84 = por %p82, %p83
    %p85 = scmp.ne.s32.totalorder %s71, %s72
    %p86 = scmp.eq.s32.totalorder %s15, 1
    %p87 = por %p85, %p86
    %p89 = scmp.ne.s32.totalorder %s72, %s88
    %p90 = scmp.eq.s32.totalorder %s15, 0
    %p91 = por %p89, %p90
    %s93 = sadd.s32 %s92, 1
    %p96 = scmp.eq.s32.totalorder %s9, 1
    %p97 = scmp.ne.s32.totalorder %s92, %s94
    %p98 = scmp.eq.s32.totalorder %s9, 0
    %p99 = por %p97, %p98
    %p100 = scmp.ne.s32.totalorder %s92, %s94
    %p101 = scmp.eq.s32.totalorder %s14, 1
    %p102 = por %p100, %p101
    %p103 = scmp.ne.s32.totalorder %s94, %s95
    %p104 = scmp.eq.s32.totalorder %s14, 0
    %p105 = por %p103, %p104
    %p106 = scmp.ne.s32.totalorder %s94, %s95
    %p107 = scmp.eq.s32.totalorder %s15, 1
    %p108 = por %p106, %p107
    %p110 = scmp.ne.s32.totalorder %s95, %s109
    %p111 = scmp.eq.s32.totalorder %s15, 0
    %p112 = por %p110, %p111
    %s113 = ssub.s32 %s16, %s35
    %s114 = ssub.s32 %s17, %s31
    %s115 = sor.u32 %s113, %s114
    %p116 = scmp.eq.s32.totalorder %s115, 0
    %s118 = sadd.s32 %s117, 1
    %s119 = scalar_select %p116, %s117, %s118
    %p122 = pneg %p116
    %p123 = scmp.eq.s32.totalorder %s9, 1
    %p124 = por %p122, %p123
    %p125 = scmp.ne.s32.totalorder %s117, %s120
    %p126 = scmp.eq.s32.totalorder %s9, 0
    %p127 = por %p125, %p126
    %p128 = scmp.ne.s32.totalorder %s117, %s120
    %p129 = scmp.eq.s32.totalorder %s14, 1
    %p130 = por %p128, %p129
    %p131 = scmp.ne.s32.totalorder %s120, %s121
    %p132 = scmp.eq.s32.totalorder %s14, 0
    %p133 = por %p131, %p132
    %p134 = scmp.ne.s32.totalorder %s120, %s121
    %p135 = scmp.eq.s32.totalorder %s15, 1
    %p136 = por %p134, %p135
    %p138 = scmp.ne.s32.totalorder %s121, %s137
    %p139 = scmp.eq.s32.totalorder %s15, 0
    %p140 = por %p138, %p139
    %p141 = scmp.le.s32.totalorder 1, %s9
    %p142 = scmp.lt.s32.totalorder %s9, 3
    %p143 = pnand %p141, %p142
    %p144 = pneg %p143
    // Predicated region
    $region9: #{discriminator_forward.5} parent=5 // pred_check
      _
    $region10: #{discriminator_forward.5} parent=5 // pred_check_branch
      %146 = sbr.rel (%p143) target = $region12
    $region11: #{discriminator_forward.5} parent=5 // pred_region
      %s147 = ssub.s32 %s9, 1
      // Predicated region
      $region13: #{discriminator_forward.5} parent=11 // pred_check
        %p148 = pneg %p84
      $region14: #{discriminator_forward.5} parent=11 // pred_check_branch
        %150 = sbr.rel (%p148) target = $region16
      $region15: #{discriminator_forward.5} parent=11 // pred_region
        %s151 = smul.u32 16, %s21
        %p152 = scmp.lt.s32.totalorder %s151, 15
        %s153 = scalar_select %p152, %s151, 15
        %s154 = smul.addr %s153, 4
        %s155 = scalar_lea.vmem %s1, %s154
        %s156 = smul.u32 16, %s21
      $region16: #{discriminator_forward.5} parent=11 // pred_fallthru
        _
      // Predicated region
      $region17: #{discriminator_forward.5} parent=11 // pred_check
        %p157 = pneg %p105
      $region18: #{discriminator_forward.5} parent=11 // pred_check_branch
        %159 = sbr.rel (%p157) target = $region20
      $region19: #{discriminator_forward.5} parent=11 // pred_region
        _
      $region20: #{discriminator_forward.5} parent=11 // pred_fallthru
        _
    $region12: #{discriminator_forward.5} parent=5 // pred_fallthru
      _
    %p160 = scmp.lt.s32.totalorder %s9, 2
    // Predicated region
    $region21: #{discriminator_forward.5} parent=5 // pred_check
      %p161 = pneg %p160
    $region22: #{discriminator_forward.5} parent=5 // pred_check_branch
      %163 = sbr.rel (%p161) target = $region24
    $region23: #{discriminator_forward.5} parent=5 // pred_region
      // Predicated region
      $region25: #{discriminator_forward.5} parent=23 // pred_check
        %p164 = pneg %p52
      $region26: #{discriminator_forward.5} parent=23 // pred_check_branch
        %166 = sbr.rel (%p164) target = $region28
      $region27: #{discriminator_forward.5} parent=23 // pred_region
        %s167 = smul.u32 2, %s17
        %p168 = scmp.lt.s32.totalorder %s16, 1
        %s169 = scalar_select %p168, %s16, 1
        %p170 = scmp.lt.s32.totalorder %s167, 1
        %s171 = scalar_select %p170, %s167, 1
        %p172 = scmp.lt.s32.totalorder %s18, 0
        %s173 = scalar_select %p172, %s18, 0
        %s174 = sadd.s32 %s173, %s171
        %s175 = smul.addr %s169, 2
        %s176 = sadd.s32 %s174, %s175
        %s177 = smul.addr %s176, 4
        %s178 = scalar_lea.vmem %s0, %s177
        %s179 = smul.u32 2, %s17
      $region28: #{discriminator_forward.5} parent=23 // pred_fallthru
        _
    $region24: #{discriminator_forward.5} parent=5 // pred_fallthru
      _
    %p180 = scmp.le.s32.totalorder 1, %s9
    %p181 = scmp.lt.s32.totalorder %s9, 3
    %p182 = pnand %p180, %p181
    %p183 = pneg %p182
    // Predicated region
    $region29: #{discriminator_forward.5} parent=5 // pred_check
      _
    $region30: #{discriminator_forward.5} parent=5 // pred_check_branch
      %185 = sbr.rel (%p182) target = $region32
    $region31: #{discriminator_forward.5} parent=5 // pred_region
      %s186 = ssub.s32 %s9, 1
      %s187 = smul.u32 2, %s20
      %p188 = scmp.lt.s32.totalorder %s19, 1
      %s189 = scalar_select %p188, %s19, 1
      %p190 = scmp.lt.s32.totalorder %s187, 1
      %s191 = scalar_select %p190, %s187, 1
      %p192 = scmp.lt.s32.totalorder %s21, 0
      %s193 = scalar_select %p192, %s21, 0
      %s194 = sadd.s32 %s193, %s191
      %s195 = smul.addr %s189, 2
      %s196 = sadd.s32 %s194, %s195
      %s197 = smul.addr %s196, 4
      %s198 = scalar_lea.vmem %s0, %s197
      %p199 = pneg %p58
      %p200 = pneg %p55
      %s201 = smul.u32 16, %s21
      %p202 = scmp.lt.s32.totalorder %s201, 15
      %s203 = scalar_select %p202, %s201, 15
      %s204 = smul.addr %s203, 4
      %s205 = scalar_lea.vmem %s1, %s204
      %p206 = pneg %p84
      %p207 = pneg %p81
      %p208 = pneg %p105
      %p209 = pneg %p102
      %p210 = pneg %p133
      %p211 = pneg %p130
      %s212 = smul.u32 2, %s20
      %p213 = scmp.lt.s32.totalorder %s19, 1
      %s214 = scalar_select %p213, %s19, 1
      %p215 = scmp.lt.s32.totalorder %s212, 1
      %s216 = scalar_select %p215, %s212, 1
      %s217 = smul.addr %s214, 2
      %s218 = sadd.s32 %s216, %s217
      %s219 = smul.addr %s218, 4
      %s220 = scalar_lea.vmem %s3, %s219
      %s221 = smul.u32 2, %s20
      %p222 = scmp.lt.s32.totalorder %s19, 1
      %s223 = scalar_select %p222, %s19, 1
      %p224 = scmp.lt.s32.totalorder %s221, 1
      %s225 = scalar_select %p224, %s221, 1
      %p226 = scmp.lt.s32.totalorder %s21, 0
      %s227 = scalar_select %p226, %s21, 0
      %s228 = sadd.s32 %s227, %s225
      %s229 = smul.addr %s223, 2
      %s230 = sadd.s32 %s228, %s229
      %s231 = smul.addr %s230, 4
      %s232 = scalar_lea.vmem %s0, %s231
      %s233 = smul.u32 2, %s20
      %s234 = smul.u32 16, %s21
      %p235 = scmp.lt.s32.totalorder %s234, 15
      %s236 = scalar_select %p235, %s234, 15
      %s237 = smul.addr %s236, 4
      %s238 = scalar_lea.vmem %s1, %s237
      %s239 = smul.u32 16, %s21
      %s240 = smul.u32 2, %s20
      %p241 = scmp.lt.s32.totalorder %s19, 1
      %s242 = scalar_select %p241, %s19, 1
      %p243 = scmp.lt.s32.totalorder %s240, 1
      %s244 = scalar_select %p243, %s240, 1
      %s245 = smul.addr %s242, 2
      %s246 = sadd.s32 %s244, %s245
      %s247 = smul.addr %s246, 4
      %s248 = scalar_lea.vmem %s3, %s247
      %s249 = smul.u32 2, %s20
      %p251 = scmp.eq.s32.totalorder %s21, 0
      // Predicated region
      $region33: #{discriminator_forward.5} parent=31 // pred_check
        %p252 = pneg %p251
      $region34: #{discriminator_forward.5} parent=31 // pred_check_branch
        %254 = sbr.rel (%p252) target = $region36
      $region35: #{discriminator_forward.5} parent=31 // pred_region
        %255 = vst [vmem:[#allocation2] sm:$0xff] 0.0
        %256 = vst [vmem:[#allocation2 + $0x8] sm:$0xff] 0.0
      $region36: #{discriminator_forward.5} parent=31 // pred_fallthru
        _
      %v257 = vld [vmem:[#allocation2] sm:$0xff]
      %v258 = vld [vmem:[#allocation2 + $0x8] sm:$0xff]
      %v259 = vld [vmem:[%s232] sm:$0xf]
      %v260 = vld [vmem:[%s232 + $0x4] sm:$0xf]
      %v261 = vld [vmem:[%s238] sm:$0xf]
      %v262 = vld [vmem:[%s238 + $0x4] sm:$0xf]
      %v263 = vld [vmem:[%s238 + $0x8] sm:$0xf]
      %v264 = vld [vmem:[%s238 + $0xc] sm:$0xf]
      %v265 = vld [vmem:[%s238 + $0x10] sm:$0xf]
      %v266 = vld [vmem:[%s238 + $0x14] sm:$0xf]
      %v267 = vld [vmem:[%s238 + $0x18] sm:$0xf]
      %v268 = vld [vmem:[%s238 + $0x1c] sm:$0xf]
      %v269 = vld [vmem:[%s238 + $0x20] sm:$0xf]
      %v270 = vld [vmem:[%s238 + $0x24] sm:$0xf]
      %v271 = vld [vmem:[%s238 + $0x28] sm:$0xf]
      %v272 = vld [vmem:[%s238 + $0x2c] sm:$0xf]
      %v273 = vld [vmem:[%s238 + $0x30] sm:$0xf]
      %v274 = vld [vmem:[%s238 + $0x34] sm:$0xf]
      %v275 = vld [vmem:[%s238 + $0x38] sm:$0xf]
      %v276 = vld [vmem:[%s238 + $0x3c] sm:$0xf]
      %v279 = vunpack.c.l.b16 %v259
      %v280 = vunpack.c.l.b16 %v260
      %v281 = vpack.c.b16 %v280, %v279
      %v299 = vunpack.c.l.b16 %v261
      %v300 = vunpack.c.l.b16 %v262
      %v301 = vunpack.c.l.b16 %v263
      %v302 = vunpack.c.l.b16 %v264
      %v303 = vunpack.c.l.b16 %v265
      %v304 = vunpack.c.l.b16 %v266
      %v305 = vunpack.c.l.b16 %v267
      %v306 = vunpack.c.l.b16 %v268
      %v307 = vunpack.c.l.b16 %v269
      %v308 = vunpack.c.l.b16 %v270
      %v309 = vunpack.c.l.b16 %v271
      %v310 = vunpack.c.l.b16 %v272
      %v311 = vunpack.c.l.b16 %v273
      %v312 = vunpack.c.l.b16 %v274
      %v313 = vunpack.c.l.b16 %v275
      %v314 = vunpack.c.l.b16 %v276
      %v315 = vpack.c.b16 %v300, %v299
      %v316 = vpack.c.b16 %v302, %v301
      %v317 = vpack.c.b16 %v304, %v303
      %v318 = vpack.c.b16 %v306, %v305
      %v319 = vpack.c.b16 %v308, %v307
      %v320 = vpack.c.b16 %v310, %v309
      %v321 = vpack.c.b16 %v312, %v311
      %v322 = vpack.c.b16 %v314, %v313
      %331 = vmatprep.subr.bf16.mxu0 0
      %332 = vmatpush1.bf16.msra.mxu0 %v315
      %333 = vmatprep.subr.bf16.mxu0 0
      %334 = vmatpush1.bf16.msra.mxu0 %v316
      %335 = vmatprep.subr.bf16.mxu0 0
      %336 = vmatpush1.bf16.msra.mxu0 %v317
      %337 = vmatprep.subr.bf16.mxu0 0
      %338 = vmatpush1.bf16.msra.mxu0 %v318
      %339 = vmatprep.subr.bf16.mxu0 0
      %340 = vmatpush1.bf16.msra.mxu0 %v319
      %341 = vmatprep.subr.bf16.mxu0 0
      %342 = vmatpush1.bf16.msra.mxu0 %v320
      %343 = vmatprep.subr.bf16.mxu0 0
      %344 = vmatpush1.bf16.msra.mxu0 %v321
      %345 = vmatprep.subr.bf16.mxu0 0
      %346 = vmatpush1.bf16.msra.mxu0 %v322
      %347 = vmatprep.subr.bf16.mxu0 0
      %348 = vmatpush1.bf16.msra.mxu0 0
      %349 = vmatprep.subr.bf16.mxu0 0
      %350 = vmatpush1.bf16.msra.mxu0 0
      %351 = vmatprep.subr.bf16.mxu0 0
      %352 = vmatpush1.bf16.msra.mxu0 0
      %353 = vmatprep.subr.bf16.mxu0 0
      %354 = vmatpush1.bf16.msra.mxu0 0
      %355 = vmatprep.subr.bf16.mxu0 0
      %356 = vmatpush1.bf16.msra.mxu0 0
      %357 = vmatprep.subr.bf16.mxu0 0
      %358 = vmatpush1.bf16.msra.mxu0 0
      %359 = vmatprep.subr.bf16.mxu0 0
      %360 = vmatpush1.bf16.msra.mxu0 0
      %361 = vmatprep.subr.bf16.mxu0 0
      %362 = vmatpush1.bf16.msra.mxu0 0
      %363 = vmatprep.mubr.bf16.mxu0 0
      %364 = vmatmul.mubr.bf16.gmra.mrb[0].mxu0 %v281
      %v365 = vpop.f32.mrb[0].mxu0
      %v366 = vadd.f32 0.0, %v365
      %v367 = vpop.f32.mrb[0].mxu0
      %v368 = vpop.f32.mrb[0].mxu0
      %v369 = vadd.f32 0.0, %v368
      %v370 = vpop.f32.mrb[0].mxu0
      %371 = vdwg.mxu0
      %v372 = vadd.f32 %v257, %v366
      %v373 = vadd.f32 %v258, %v369
      %374 = vst [vmem:[#allocation2] sm:$0xff] %v372
      %375 = vst [vmem:[#allocation2 + $0x8] sm:$0xff] %v373
      // Predicated region
      $region37: #{discriminator_forward.5} parent=31 // pred_check
        %p376 = pneg %p251
      $region38: #{discriminator_forward.5} parent=31 // pred_check_branch
        %378 = sbr.rel (%p376) target = $region40
      $region39: #{discriminator_forward.5} parent=31 // pred_region
        %v379 = vld [vmem:[#allocation2] sm:$0xff]
        %v380 = vld [vmem:[#allocation2 + $0x8] sm:$0xff]
        %v381 = vld [vmem:[%s2] sm:$0x1]
        %v383 = vlaneseq
        %v384 = vshrl.u32 %v383, 7
        %v385 = vsub.s32 0, %v384
        %v386 = vrot.slane %v381, %v385
        %v388 = vadd.f32 %v379, %v386
        %v389 = vadd.f32 %v380, %v386
        %v390 = vmul.f32 %v388, 0.01
        %v391 = vmul.f32 %v389, 0.01
        %v392 = vmax.f32 %v388, %v390
        %v393 = vmax.f32 %v389, %v391
        %v394 = vpack.c.bf16 %v393, %v392
        %v396 = vunpack.c.l.b16 %v394
        %v397 = vunpack.c.h.b16 %v394
        %v398 = vpack.c.b16 %v396, %v396
        %v399 = vpack.c.b16 %v397, %v397
        %402 = vst [vmem:[%s248] sm:$0xf] %v398
        %403 = vst [vmem:[%s248 + $0x4] sm:$0xf] %v399
      $region40: #{discriminator_forward.5} parent=31 // pred_fallthru
        _
      %s404 = smul.u32 2, %s20
      %p405 = scmp.lt.s32.totalorder %s19, 1
      %s406 = scalar_select %p405, %s19, 1
      %p407 = scmp.lt.s32.totalorder %s404, 1
      %s408 = scalar_select %p407, %s404, 1
      %s409 = smul.addr %s406, 2
      %s410 = sadd.s32 %s408, %s409
      %s411 = smul.addr %s410, 4
      %s412 = scalar_lea.vmem %s3, %s411
      // Predicated region
      $region41: #{discriminator_forward.5} parent=31 // pred_check
        %p413 = pneg %p130
      $region42: #{discriminator_forward.5} parent=31 // pred_check_branch
        %415 = sbr.rel (%p413) target = $region44
      $region43: #{discriminator_forward.5} parent=31 // pred_region
        %s416 = smul.u32 2, %s20
      $region44: #{discriminator_forward.5} parent=31 // pred_fallthru
        _
    $region32: #{discriminator_forward.5} parent=5 // pred_fallthru
      _
    %p417 = scmp.le.s32.totalorder 2, %s9
    // Predicated region
    $region45: #{discriminator_forward.5} parent=5 // pred_check
      %p418 = pneg %p417
    $region46: #{discriminator_forward.5} parent=5 // pred_check_branch
      %420 = sbr.rel (%p418) target = $region48
    $region47: #{discriminator_forward.5} parent=5 // pred_region
      %s421 = ssub.s32 %s9, 2
      // Predicated region
      $region49: #{discriminator_forward.5} parent=47 // pred_check
        %p422 = pneg %p136
      $region50: #{discriminator_forward.5} parent=47 // pred_check_branch
        %424 = sbr.rel (%p422) target = $region52
      $region51: #{discriminator_forward.5} parent=47 // pred_region
        %s425 = smul.u32 2, %s23
        %p426 = scmp.lt.s32.totalorder %s22, 1
        %s427 = scalar_select %p426, %s22, 1
        %p428 = scmp.lt.s32.totalorder %s425, 1
        %s429 = scalar_select %p428, %s425, 1
        %s430 = smul.addr %s427, 2
        %s431 = sadd.s32 %s429, %s430
        %s432 = smul.addr %s431, 4
        %s433 = scalar_lea.vmem %s3, %s432
      $region52: #{discriminator_forward.5} parent=47 // pred_fallthru
        _
    $region48: #{discriminator_forward.5} parent=5 // pred_fallthru
      _
  $region6: #{discriminator_forward.5} parent=0 // loop_footer
    %s13 = sadd.s32 1, %s9
  $region7: #{discriminator_forward.5} parent=0 // loop_footer_branch
    %8 = sbr.rel target = $region3
  $region8: #{discriminator_forward.5} parent=0 // loop_exit
    _

// kernel: discriminator_forward.7
$region0: #{discriminator_forward.7}
  #allocation0 [shape = 'u32[]', space=smem, size = 0x4, offset = 0x4, fixed_abs, tag = 'smem constant byte address 0x4 - core index']
  #allocation1 [shape = 'u32[144,128]{1,0:T(1,128)}', space=vmem, size = 0x12000, scoped, tag = 'internal scratch']
  #allocation2 [shape = 'f32[8,128]{1,0:T(8,128)}', space=vmem, size = 0x1000, scoped, tag = 'scratch operand']
  %s0 = inlined_call_operand.vmem [shape: bf16[2,8,256], index: 0, kind: input, shape index: {}]
  %s1 = inlined_call_operand.vmem [shape: bf16[256,128], index: 1, kind: input, shape index: {}]
  %s2 = inlined_call_operand.vmem [shape: f32[1,128], index: 2, kind: input, shape index: {}]
  %s3 = inlined_call_operand.vmem [shape: f32[2,8,128], index: 3, kind: output, shape index: {}]
  %s4 = sld [smem:[#allocation0]]
  $region53: #{discriminator_forward.7} parent=0
    _
  %s6 = ssub.s32 1, %s4
  %s7 = scalar_select 0, %s6, %s4
  loop: start=0, step=1, limit=4
  $region2: #{discriminator_forward.7} parent=0 // loop_pre_header
    _
  $region3: #{discriminator_forward.7} parent=0 // loop_header
    %s9 = sphi 0, %s13
    %p10 = scmp.ge.s32.totalorder %s9, 4
    %s16 = sphi 0, %s35
    %s17 = sphi 0, %s31
    %s18 = sphi 0, %s27
    %s19 = sphi 0, %s16
    %s20 = sphi 0, %s17
    %s21 = sphi 0, %s18
    %s22 = sphi 0, %s19
    %s23 = sphi 0, %s20
    %s24 = sphi 0, %s21
    %s42 = sphi 0, %s44
    %s45 = sphi 0, %s42
    %s46 = sphi 0, %s45
    %s62 = sphi 0, %s46
    %s68 = sphi 0, %s70
    %s71 = sphi 0, %s68
    %s72 = sphi 0, %s71
    %s88 = sphi 0, %s72
    %s92 = sphi 0, %s92
    %s94 = sphi 0, %s92
    %s95 = sphi 0, %s94
    %s109 = sphi 0, %s95
    %s117 = sphi 0, %s119
    %s120 = sphi 0, %s117
    %s121 = sphi 0, %s120
    %s137 = sphi 0, %s121
  $region4: #{discriminator_forward.7} parent=0 // loop_header_branch
    %12 = sbr.rel (%p10) target = $region8
  $region5: #{discriminator_forward.7} parent=0 // loop_body
    %s14 = ssub.s32 %s9, 1
    %s15 = ssub.s32 %s9, 2
    %s25 = sadd.s32 1, %s18
    %p26 = scmp.ge.s32.totalorder %s25, 1
    %s27 = scalar_select %p26, 0, %s25
    %s28 = sadd.s32 1, %s17
    %s29 = scalar_select %p26, %s28, %s17
    %p30 = scmp.ge.s32.totalorder %s29, 1
    %s31 = scalar_select %p30, 0, %s29
    %s32 = sadd.s32 1, %s16
    %s33 = scalar_select %p30, %s32, %s16
    %p34 = scmp.ge.s32.totalorder %s33, 2
    %s35 = scalar_select %p34, 0, %s33
    %s36 = ssub.s32 %s16, %s35
    %s37 = ssub.s32 %s17, %s31
    %s38 = sor.u32 %s36, %s37
    %s39 = ssub.s32 %s18, %s27
    %s40 = sor.u32 %s38, %s39
    %p41 = scmp.eq.s32.totalorder %s40, 0
    %s43 = sadd.s32 %s42, 1
    %s44 = scalar_select %p41, %s42, %s43
    %p47 = pneg %p41
    %p48 = scmp.eq.s32.totalorder %s9, 1
    %p49 = por %p47, %p48
    %p50 = scmp.ne.s32.totalorder %s42, %s45
    %p51 = scmp.eq.s32.totalorder %s9, 0
    %p52 = por %p50, %p51
    %p53 = scmp.ne.s32.totalorder %s42, %s45
    %p54 = scmp.eq.s32.totalorder %s14, 1
    %p55 = por %p53, %p54
    %p56 = scmp.ne.s32.totalorder %s45, %s46
    %p57 = scmp.eq.s32.totalorder %s14, 0
    %p58 = por %p56, %p57
    %p59 = scmp.ne.s32.totalorder %s45, %s46
    %p60 = scmp.eq.s32.totalorder %s15, 1
    %p61 = por %p59, %p60
    %p63 = scmp.ne.s32.totalorder %s46, %s62
    %p64 = scmp.eq.s32.totalorder %s15, 0
    %p65 = por %p63, %p64
    %s66 = ssub.s32 %s18, %s27
    %p67 = scmp.eq.s32.totalorder %s66, 0
    %s69 = sadd.s32 %s68, 1
    %s70 = scalar_select %p67, %s68, %s69
    %p73 = pneg %p67
    %p74 = scmp.eq.s32.totalorder %s9, 1
    %p75 = por %p73, %p74
    %p76 = scmp.ne.s32.totalorder %s68, %s71
    %p77 = scmp.eq.s32.totalorder %s9, 0
    %p78 = por %p76, %p77
    %p79 = scmp.ne.s32.totalorder %s68, %s71
    %p80 = scmp.eq.s32.totalorder %s14, 1
    %p81 = por %p79, %p80
    %p82 = scmp.ne.s32.totalorder %s71, %s72
    %p83 = scmp.eq.s32.totalorder %s14, 0
    %p84 = por %p82, %p83
    %p85 = scmp.ne.s32.totalorder %s71, %s72
    %p86 = scmp.eq.s32.totalorder %s15, 1
    %p87 = por %p85, %p86
    %p89 = scmp.ne.s32.totalorder %s72, %s88
    %p90 = scmp.eq.s32.totalorder %s15, 0
    %p91 = por %p89, %p90
    %s93 = sadd.s32 %s92, 1
    %p96 = scmp.eq.s32.totalorder %s9, 1
    %p97 = scmp.ne.s32.totalorder %s92, %s94
    %p98 = scmp.eq.s32.totalorder %s9, 0
    %p99 = por %p97, %p98
    %p100 = scmp.ne.s32.totalorder %s92, %s94
    %p101 = scmp.eq.s32.totalorder %s14, 1
    %p102 = por %p100, %p101
    %p103 = scmp.ne.s32.totalorder %s94, %s95
    %p104 = scmp.eq.s32.totalorder %s14, 0
    %p105 = por %p103, %p104
    %p106 = scmp.ne.s32.totalorder %s94, %s95
    %p107 = scmp.eq.s32.totalorder %s15, 1
    %p108 = por %p106, %p107
    %p110 = scmp.ne.s32.totalorder %s95, %s109
    %p111 = scmp.eq.s32.totalorder %s15, 0
    %p112 = por %p110, %p111
    %s113 = ssub.s32 %s16, %s35
    %s114 = ssub.s32 %s17, %s31
    %s115 = sor.u32 %s113, %s114
    %p116 = scmp.eq.s32.totalorder %s115, 0
    %s118 = sadd.s32 %s117, 1
    %s119 = scalar_select %p116, %s117, %s118
    %p122 = pneg %p116
    %p123 = scmp.eq.s32.totalorder %s9, 1
    %p124 = por %p122, %p123
    %p125 = scmp.ne.s32.totalorder %s117, %s120
    %p126 = scmp.eq.s32.totalorder %s9, 0
    %p127 = por %p125, %p126
    %p128 = scmp.ne.s32.totalorder %s117, %s120
    %p129 = scmp.eq.s32.totalorder %s14, 1
    %p130 = por %p128, %p129
    %p131 = scmp.ne.s32.totalorder %s120, %s121
    %p132 = scmp.eq.s32.totalorder %s14, 0
    %p133 = por %p131, %p132
    %p134 = scmp.ne.s32.totalorder %s120, %s121
    %p135 = scmp.eq.s32.totalorder %s15, 1
    %p136 = por %p134, %p135
    %p138 = scmp.ne.s32.totalorder %s121, %s137
    %p139 = scmp.eq.s32.totalorder %s15, 0
    %p140 = por %p138, %p139
    %p141 = scmp.le.s32.totalorder 1, %s9
    %p142 = scmp.lt.s32.totalorder %s9, 3
    %p143 = pnand %p141, %p142
    %p144 = pneg %p143
    // Predicated region
    $region9: #{discriminator_forward.7} parent=5 // pred_check
      _
    $region10: #{discriminator_forward.7} parent=5 // pred_check_branch
      %146 = sbr.rel (%p143) target = $region12
    $region11: #{discriminator_forward.7} parent=5 // pred_region
      %s147 = ssub.s32 %s9, 1
      // Predicated region
      $region13: #{discriminator_forward.7} parent=11 // pred_check
        %p148 = pneg %p84
      $region14: #{discriminator_forward.7} parent=11 // pred_check_branch
        %150 = sbr.rel (%p148) target = $region16
      $region15: #{discriminator_forward.7} parent=11 // pred_region
        %s151 = smul.u32 32, %s21
        %p152 = scmp.lt.s32.totalorder %s151, 31
        %s153 = scalar_select %p152, %s151, 31
        %s154 = smul.addr %s153, 4
        %s155 = scalar_lea.vmem %s1, %s154
        %s156 = smul.u32 32, %s21
      $region16: #{discriminator_forward.7} parent=11 // pred_fallthru
        _
      // Predicated region
      $region17: #{discriminator_forward.7} parent=11 // pred_check
        %p157 = pneg %p105
      $region18: #{discriminator_forward.7} parent=11 // pred_check_branch
        %159 = sbr.rel (%p157) target = $region20
      $region19: #{discriminator_forward.7} parent=11 // pred_region
        _
      $region20: #{discriminator_forward.7} parent=11 // pred_fallthru
        _
    $region12: #{discriminator_forward.7} parent=5 // pred_fallthru
      _
    %p160 = scmp.lt.s32.totalorder %s9, 2
    // Predicated region
    $region21: #{discriminator_forward.7} parent=5 // pred_check
      %p161 = pneg %p160
    $region22: #{discriminator_forward.7} parent=5 // pred_check_branch
      %163 = sbr.rel (%p161) target = $region24
    $region23: #{discriminator_forward.7} parent=5 // pred_region
      // Predicated region
      $region25: #{discriminator_forward.7} parent=23 // pred_check
        %p164 = pneg %p52
      $region26: #{discriminator_forward.7} parent=23 // pred_check_branch
        %166 = sbr.rel (%p164) target = $region28
      $region27: #{discriminator_forward.7} parent=23 // pred_region
        %s167 = smul.u32 2, %s18
        %p168 = scmp.lt.s32.totalorder %s16, 1
        %s169 = scalar_select %p168, %s16, 1
        %p170 = scmp.lt.s32.totalorder %s17, 0
        %s171 = scalar_select %p170, %s17, 0
        %p172 = scmp.lt.s32.totalorder %s167, 1
        %s173 = scalar_select %p172, %s167, 1
        %s174 = smul.addr %s171, 2
        %s175 = sadd.s32 %s173, %s174
        %s176 = smul.addr %s169, 2
        %s177 = sadd.s32 %s175, %s176
        %s178 = smul.addr %s177, 4
        %s179 = scalar_lea.vmem %s0, %s178
        %s180 = smul.u32 2, %s18
      $region28: #{discriminator_forward.7} parent=23 // pred_fallthru
        _
    $region24: #{discriminator_forward.7} parent=5 // pred_fallthru
      _
    %p181 = scmp.le.s32.totalorder 1, %s9
    %p182 = scmp.lt.s32.totalorder %s9, 3
    %p183 = pnand %p181, %p182
    %p184 = pneg %p183
    // Predicated region
    $region29: #{discriminator_forward.7} parent=5 // pred_check
      _
    $region30: #{discriminator_forward.7} parent=5 // pred_check_branch
      %186 = sbr.rel (%p183) target = $region32
    $region31: #{discriminator_forward.7} parent=5 // pred_region
      %s187 = ssub.s32 %s9, 1
      %s188 = smul.u32 2, %s21
      %p189 = scmp.lt.s32.totalorder %s19, 1
      %s190 = scalar_select %p189, %s19, 1
      %p191 = scmp.lt.s32.totalorder %s20, 0
      %s192 = scalar_select %p191, %s20, 0
      %p193 = scmp.lt.s32.totalorder %s188, 1
      %s194 = scalar_select %p193, %s188, 1
      %s195 = smul.addr %s192, 2
      %s196 = sadd.s32 %s194, %s195
      %s197 = smul.addr %s190, 2
      %s198 = sadd.s32 %s196, %s197
      %s199 = smul.addr %s198, 4
      %s200 = scalar_lea.vmem %s0, %s199
      %p201 = pneg %p58
      %p202 = pneg %p55
      %s203 = smul.u32 32, %s21
      %p204 = scmp.lt.s32.totalorder %s203, 31
      %s205 = scalar_select %p204, %s203, 31
      %s206 = smul.addr %s205, 4
      %s207 = scalar_lea.vmem %s1, %s206
      %p208 = pneg %p84
      %p209 = pneg %p81
      %p210 = pneg %p105
      %p211 = pneg %p102
      %p212 = pneg %p133
      %p213 = pneg %p130
      %p214 = scmp.lt.s32.totalorder %s19, 1
      %s215 = scalar_select %p214, %s19, 1
      %p216 = scmp.lt.s32.totalorder %s20, 0
      %s217 = scalar_select %p216, %s20, 0
      %s218 = sadd.s32 %s217, %s215
      %s219 = smul.addr %s218, 8
      %s220 = scalar_lea.vmem %s3, %s219
      %s221 = smul.u32 2, %s21
      %p222 = scmp.lt.s32.totalorder %s19, 1
      %s223 = scalar_select %p222, %s19, 1
      %p224 = scmp.lt.s32.totalorder %s20, 0
      %s225 = scalar_select %p224, %s20, 0
      %p226 = scmp.lt.s32.totalorder %s221, 1
      %s227 = scalar_select %p226, %s221, 1
      %s228 = smul.addr %s225, 2
      %s229 = sadd.s32 %s227, %s228
      %s230 = smul.addr %s223, 2
      %s231 = sadd.s32 %s229, %s230
      %s232 = smul.addr %s231, 4
      %s233 = scalar_lea.vmem %s0, %s232
      %s234 = smul.u32 2, %s21
      %s235 = smul.u32 32, %s21
      %p236 = scmp.lt.s32.totalorder %s235, 31
      %s237 = scalar_select %p236, %s235, 31
      %s238 = smul.addr %s237, 4
      %s239 = scalar_lea.vmem %s1, %s238
      %s240 = smul.u32 32, %s21
      %p241 = scmp.lt.s32.totalorder %s19, 1
      %s242 = scalar_select %p241, %s19, 1
      %p243 = scmp.lt.s32.totalorder %s20, 0
      %s244 = scalar_select %p243, %s20, 0
      %s245 = sadd.s32 %s244, %s242
      %s246 = smul.addr %s245, 8
      %s247 = scalar_lea.vmem %s3, %s246
      %p249 = scmp.eq.s32.totalorder %s21, 0
      // Predicated region
      $region33: #{discriminator_forward.7} parent=31 // pred_check
        %p250 = pneg %p249
      $region34: #{discriminator_forward.7} parent=31 // pred_check_branch
        %252 = sbr.rel (%p250) target = $region36
      $region35: #{discriminator_forward.7} parent=31 // pred_region
        %253 = vst [vmem:[#allocation2] sm:$0xff] 0.0
      $region36: #{discriminator_forward.7} parent=31 // pred_fallthru
        _
      %v254 = vld [vmem:[#allocation2] sm:$0xff]
      %v255 = vld [vmem:[%s233] sm:$0xff]
      %v256 = vld [vmem:[%s239] sm:$0xf]
      %v257 = vld [vmem:[%s239 + $0x4] sm:$0xf]
      %v258 = vld [vmem:[%s239 + $0x8] sm:$0xf]
      %v259 = vld [vmem:[%s239 + $0xc] sm:$0xf]
      %v260 = vld [vmem:[%s239 + $0x10] sm:$0xf]
      %v261 = vld [vmem:[%s239 + $0x14] sm:$0xf]
      %v262 = vld [vmem:[%s239 + $0x18] sm:$0xf]
      %v263 = vld [vmem:[%s239 + $0x1c] sm:$0xf]
      %v264 = vld [vmem:[%s239 + $0x20] sm:$0xf]
      %v265 = vld [vmem:[%s239 + $0x24] sm:$0xf]
      %v266 = vld [vmem:[%s239 + $0x28] sm:$0xf]
      %v267 = vld [vmem:[%s239 + $0x2c] sm:$0xf]
      %v268 = vld [vmem:[%s239 + $0x30] sm:$0xf]
      %v269 = vld [vmem:[%s239 + $0x34] sm:$0xf]
      %v270 = vld [vmem:[%s239 + $0x38] sm:$0xf]
      %v271 = vld [vmem:[%s239 + $0x3c] sm:$0xf]
      %v272 = vld [vmem:[%s239 + $0x40] sm:$0xf]
      %v273 = vld [vmem:[%s239 + $0x44] sm:$0xf]
      %v274 = vld [vmem:[%s239 + $0x48] sm:$0xf]
      %v275 = vld [vmem:[%s239 + $0x4c] sm:$0xf]
      %v276 = vld [vmem:[%s239 + $0x50] sm:$0xf]
      %v277 = vld [vmem:[%s239 + $0x54] sm:$0xf]
      %v278 = vld [vmem:[%s239 + $0x58] sm:$0xf]
      %v279 = vld [vmem:[%s239 + $0x5c] sm:$0xf]
      %v280 = vld [vmem:[%s239 + $0x60] sm:$0xf]
      %v281 = vld [vmem:[%s239 + $0x64] sm:$0xf]
      %v282 = vld [vmem:[%s239 + $0x68] sm:$0xf]
      %v283 = vld [vmem:[%s239 + $0x6c] sm:$0xf]
      %v284 = vld [vmem:[%s239 + $0x70] sm:$0xf]
      %v285 = vld [vmem:[%s239 + $0x74] sm:$0xf]
      %v286 = vld [vmem:[%s239 + $0x78] sm:$0xf]
      %v287 = vld [vmem:[%s239 + $0x7c] sm:$0xf]
      %v289 = vunpack.c.l.b16 %v255
      %v290 = vunpack.c.h.b16 %v255
      %v291 = vpack.c.b16 %v289, %v289
      %v292 = vpack.c.b16 %v290, %v290
      %v327 = vunpack.c.l.b16 %v256
      %v328 = vunpack.c.l.b16 %v257
      %v329 = vunpack.c.l.b16 %v258
      %v330 = vunpack.c.l.b16 %v259
      %v331 = vunpack.c.l.b16 %v260
      %v332 = vunpack.c.l.b16 %v261
      %v333 = vunpack.c.l.b16 %v262
      %v334 = vunpack.c.l.b16 %v263
      %v335 = vunpack.c.l.b16 %v264
      %v336 = vunpack.c.l.b16 %v265
      %v337 = vunpack.c.l.b16 %v266
      %v338 = vunpack.c.l.b16 %v267
      %v339 = vunpack.c.l.b16 %v268
      %v340 = vunpack.c.l.b16 %v269
      %v341 = vunpack.c.l.b16 %v270
      %v342 = vunpack.c.l.b16 %v271
      %v343 = vunpack.c.l.b16 %v272
      %v344 = vunpack.c.l.b16 %v273
      %v345 = vunpack.c.l.b16 %v274
      %v346 = vunpack.c.l.b16 %v275
      %v347 = vunpack.c.l.b16 %v276
      %v348 = vunpack.c.l.b16 %v277
      %v349 = vunpack.c.l.b16 %v278
      %v350 = vunpack.c.l.b16 %v279
      %v351 = vunpack.c.l.b16 %v280
      %v352 = vunpack.c.l.b16 %v281
      %v353 = vunpack.c.l.b16 %v282
      %v354 = vunpack.c.l.b16 %v283
      %v355 = vunpack.c.l.b16 %v284
      %v356 = vunpack.c.l.b16 %v285
      %v357 = vunpack.c.l.b16 %v286
      %v358 = vunpack.c.l.b16 %v287
      %v359 = vpack.c.b16 %v328, %v327
      %v360 = vpack.c.b16 %v330, %v329
      %v361 = vpack.c.b16 %v332, %v331
      %v362 = vpack.c.b16 %v334, %v333
      %v363 = vpack.c.b16 %v336, %v335
      %v364 = vpack.c.b16 %v338, %v337
      %v365 = vpack.c.b16 %v340, %v339
      %v366 = vpack.c.b16 %v342, %v341
      %v367 = vpack.c.b16 %v344, %v343
      %v368 = vpack.c.b16 %v346, %v345
      %v369 = vpack.c.b16 %v348, %v347
      %v370 = vpack.c.b16 %v350, %v349
      %v371 = vpack.c.b16 %v352, %v351
      %v372 = vpack.c.b16 %v354, %v353
      %v373 = vpack.c.b16 %v356, %v355
      %v374 = vpack.c.b16 %v358, %v357
      %391 = vmatprep.subr.bf16.mxu0 0
      %392 = vmatpush1.bf16.msra.mxu0 %v359
      %393 = vmatprep.subr.bf16.mxu0 0
      %394 = vmatpush1.bf16.msra.mxu0 %v360
      %395 = vmatprep.subr.bf16.mxu0 0
      %396 = vmatpush1.bf16.msra.mxu0 %v361
      %397 = vmatprep.subr.bf16.mxu0 0
      %398 = vmatpush1.bf16.msra.mxu0 %v362
      %399 = vmatprep.subr.bf16.mxu0 0
      %400 = vmatpush1.bf16.msra.mxu0 %v363
      %401 = vmatprep.subr.bf16.mxu0 0
      %402 = vmatpush1.bf16.msra.mxu0 %v364
      %403 = vmatprep.subr.bf16.mxu0 0
      %404 = vmatpush1.bf16.msra.mxu0 %v365
      %405 = vmatprep.subr.bf16.mxu0 0
      %406 = vmatpush1.bf16.msra.mxu0 %v366
      %407 = vmatprep.subr.bf16.mxu0 0
      %408 = vmatpush1.bf16.msra.mxu0 %v367
      %409 = vmatprep.subr.bf16.mxu0 0
      %410 = vmatpush1.bf16.msra.mxu0 %v368
      %411 = vmatprep.subr.bf16.mxu0 0
      %412 = vmatpush1.bf16.msra.mxu0 %v369
      %413 = vmatprep.subr.bf16.mxu0 0
      %414 = vmatpush1.bf16.msra.mxu0 %v370
      %415 = vmatprep.subr.bf16.mxu0 0
      %416 = vmatpush1.bf16.msra.mxu0 %v371
      %417 = vmatprep.subr.bf16.mxu0 0
      %418 = vmatpush1.bf16.msra.mxu0 %v372
      %419 = vmatprep.subr.bf16.mxu0 0
      %420 = vmatpush1.bf16.msra.mxu0 %v373
      %421 = vmatprep.subr.bf16.mxu0 0
      %422 = vmatpush1.bf16.msra.mxu0 %v374
      %423 = vmatprep.mubr.bf16.mxu0 %v292
      %424 = vmatmul.mubr.bf16.gmra.mrb[0].mxu0 %v291
      %v425 = vpop.f32.mrb[0].mxu0
      %v426 = vadd.f32 0.0, %v425
      %v427 = vpop.f32.mrb[0].mxu0
      %v428 = vpop.f32.mrb[0].mxu0
      %v429 = vpop.f32.mrb[0].mxu0
      %430 = vdwg.mxu0
      %v431 = vadd.f32 %v254, %v426
      %432 = vst [vmem:[#allocation2] sm:$0xff] %v431
      // Predicated region
      $region37: #{discriminator_forward.7} parent=31 // pred_check
        %p433 = pneg %p249
      $region38: #{discriminator_forward.7} parent=31 // pred_check_branch
        %435 = sbr.rel (%p433) target = $region40
      $region39: #{discriminator_forward.7} parent=31 // pred_region
        %v436 = vld [vmem:[#allocation2] sm:$0xff]
        %v437 = vld [vmem:[%s2] sm:$0x1]
        %v439 = vlaneseq
        %v440 = vshrl.u32 %v439, 7
        %v441 = vsub.s32 0, %v440
        %v442 = vrot.slane %v437, %v441
        %v444 = vadd.f32 %v436, %v442
        %445 = vst [vmem:[%s247] sm:$0xff] %v444
      $region40: #{discriminator_forward.7} parent=31 // pred_fallthru
        _
      %p446 = scmp.lt.s32.totalorder %s19, 1
      %s447 = scalar_select %p446, %s19, 1
      %p448 = scmp.lt.s32.totalorder %s20, 0
      %s449 = scalar_select %p448, %s20, 0
      %s450 = sadd.s32 %s449, %s447
      %s451 = smul.addr %s450, 8
      %s452 = scalar_lea.vmem %s3, %s451
      // Predicated region
      $region41: #{discriminator_forward.7} parent=31 // pred_check
        %p453 = pneg %p130
      $region42: #{discriminator_forward.7} parent=31 // pred_check_branch
        %455 = sbr.rel (%p453) target = $region44
      $region43: #{discriminator_forward.7} parent=31 // pred_region
        _
      $region44: #{discriminator_forward.7} parent=31 // pred_fallthru
        _
    $region32: #{discriminator_forward.7} parent=5 // pred_fallthru
      _
    %p456 = scmp.le.s32.totalorder 2, %s9
    // Predicated region
    $region45: #{discriminator_forward.7} parent=5 // pred_check
      %p457 = pneg %p456
    $region46: #{discriminator_forward.7} parent=5 // pred_check_branch
      %459 = sbr.rel (%p457) target = $region48
    $region47: #{discriminator_forward.7} parent=5 // pred_region
      %s460 = ssub.s32 %s9, 2
      // Predicated region
      $region49: #{discriminator_forward.7} parent=47 // pred_check
        %p461 = pneg %p136
      $region50: #{discriminator_forward.7} parent=47 // pred_check_branch
        %463 = sbr.rel (%p461) target = $region52
      $region51: #{discriminator_forward.7} parent=47 // pred_region
        %p464 = scmp.lt.s32.totalorder %s22, 1
        %s465 = scalar_select %p464, %s22, 1
        %p466 = scmp.lt.s32.totalorder %s23, 0
        %s467 = scalar_select %p466, %s23, 0
        %s468 = sadd.s32 %s467, %s465
        %s469 = smul.addr %s468, 8
        %s470 = scalar_lea.vmem %s3, %s469
      $region52: #{discriminator_forward.7} parent=47 // pred_fallthru
        _
    $region48: #{discriminator_forward.7} parent=5 // pred_fallthru
      _
  $region6: #{discriminator_forward.7} parent=0 // loop_footer
    %s13 = sadd.s32 1, %s9
  $region7: #{discriminator_forward.7} parent=0 // loop_footer_branch
    %8 = sbr.rel target = $region3
  $region8: #{discriminator_forward.7} parent=0 // loop_exit
    _

// kernel: discriminator_forward.6
$region0: #{discriminator_forward.6}
  #allocation0 [shape = 'u32[]', space=smem, size = 0x4, offset = 0x4, fixed_abs, tag = 'smem constant byte address 0x4 - core index']
  #allocation1 [shape = 'u32[144,128]{1,0:T(1,128)}', space=vmem, size = 0x12000, scoped, tag = 'internal scratch']
  #allocation2 [shape = 'f32[16,128]{1,0:T(8,128)}', space=vmem, size = 0x2000, scoped, tag = 'scratch operand']
  %s0 = inlined_call_operand.vmem [shape: bf16[2,16,256], index: 0, kind: input, shape index: {}]
  %s1 = inlined_call_operand.vmem [shape: bf16[256,128], index: 1, kind: input, shape index: {}]
  %s2 = inlined_call_operand.vmem [shape: f32[1,128], index: 2, kind: input, shape index: {}]
  %s3 = inlined_call_operand.vmem [shape: f32[2,16,128], index: 3, kind: output, shape index: {}]
  %s4 = sld [smem:[#allocation0]]
  $region53: #{discriminator_forward.6} parent=0
    _
  %s6 = ssub.s32 1, %s4
  %s7 = scalar_select 0, %s6, %s4
  loop: start=0, step=1, limit=4
  $region2: #{discriminator_forward.6} parent=0 // loop_pre_header
    _
  $region3: #{discriminator_forward.6} parent=0 // loop_header
    %s9 = sphi 0, %s13
    %p10 = scmp.ge.s32.totalorder %s9, 4
    %s16 = sphi 0, %s35
    %s17 = sphi 0, %s31
    %s18 = sphi 0, %s27
    %s19 = sphi 0, %s16
    %s20 = sphi 0, %s17
    %s21 = sphi 0, %s18
    %s22 = sphi 0, %s19
    %s23 = sphi 0, %s20
    %s24 = sphi 0, %s21
    %s42 = sphi 0, %s44
    %s45 = sphi 0, %s42
    %s46 = sphi 0, %s45
    %s62 = sphi 0, %s46
    %s68 = sphi 0, %s70
    %s71 = sphi 0, %s68
    %s72 = sphi 0, %s71
    %s88 = sphi 0, %s72
    %s92 = sphi 0, %s92
    %s94 = sphi 0, %s92
    %s95 = sphi 0, %s94
    %s109 = sphi 0, %s95
    %s117 = sphi 0, %s119
    %s120 = sphi 0, %s117
    %s121 = sphi 0, %s120
    %s137 = sphi 0, %s121
  $region4: #{discriminator_forward.6} parent=0 // loop_header_branch
    %12 = sbr.rel (%p10) target = $region8
  $region5: #{discriminator_forward.6} parent=0 // loop_body
    %s14 = ssub.s32 %s9, 1
    %s15 = ssub.s32 %s9, 2
    %s25 = sadd.s32 1, %s18
    %p26 = scmp.ge.s32.totalorder %s25, 1
    %s27 = scalar_select %p26, 0, %s25
    %s28 = sadd.s32 1, %s17
    %s29 = scalar_select %p26, %s28, %s17
    %p30 = scmp.ge.s32.totalorder %s29, 1
    %s31 = scalar_select %p30, 0, %s29
    %s32 = sadd.s32 1, %s16
    %s33 = scalar_select %p30, %s32, %s16
    %p34 = scmp.ge.s32.totalorder %s33, 2
    %s35 = scalar_select %p34, 0, %s33
    %s36 = ssub.s32 %s16, %s35
    %s37 = ssub.s32 %s17, %s31
    %s38 = sor.u32 %s36, %s37
    %s39 = ssub.s32 %s18, %s27
    %s40 = sor.u32 %s38, %s39
    %p41 = scmp.eq.s32.totalorder %s40, 0
    %s43 = sadd.s32 %s42, 1
    %s44 = scalar_select %p41, %s42, %s43
    %p47 = pneg %p41
    %p48 = scmp.eq.s32.totalorder %s9, 1
    %p49 = por %p47, %p48
    %p50 = scmp.ne.s32.totalorder %s42, %s45
    %p51 = scmp.eq.s32.totalorder %s9, 0
    %p52 = por %p50, %p51
    %p53 = scmp.ne.s32.totalorder %s42, %s45
    %p54 = scmp.eq.s32.totalorder %s14, 1
    %p55 = por %p53, %p54
    %p56 = scmp.ne.s32.totalorder %s45, %s46
    %p57 = scmp.eq.s32.totalorder %s14, 0
    %p58 = por %p56, %p57
    %p59 = scmp.ne.s32.totalorder %s45, %s46
    %p60 = scmp.eq.s32.totalorder %s15, 1
    %p61 = por %p59, %p60
    %p63 = scmp.ne.s32.totalorder %s46, %s62
    %p64 = scmp.eq.s32.totalorder %s15, 0
    %p65 = por %p63, %p64
    %s66 = ssub.s32 %s18, %s27
    %p67 = scmp.eq.s32.totalorder %s66, 0
    %s69 = sadd.s32 %s68, 1
    %s70 = scalar_select %p67, %s68, %s69
    %p73 = pneg %p67
    %p74 = scmp.eq.s32.totalorder %s9, 1
    %p75 = por %p73, %p74
    %p76 = scmp.ne.s32.totalorder %s68, %s71
    %p77 = scmp.eq.s32.totalorder %s9, 0
    %p78 = por %p76, %p77
    %p79 = scmp.ne.s32.totalorder %s68, %s71
    %p80 = scmp.eq.s32.totalorder %s14, 1
    %p81 = por %p79, %p80
    %p82 = scmp.ne.s32.totalorder %s71, %s72
    %p83 = scmp.eq.s32.totalorder %s14, 0
    %p84 = por %p82, %p83
    %p85 = scmp.ne.s32.totalorder %s71, %s72
    %p86 = scmp.eq.s32.totalorder %s15, 1
    %p87 = por %p85, %p86
    %p89 = scmp.ne.s32.totalorder %s72, %s88
    %p90 = scmp.eq.s32.totalorder %s15, 0
    %p91 = por %p89, %p90
    %s93 = sadd.s32 %s92, 1
    %p96 = scmp.eq.s32.totalorder %s9, 1
    %p97 = scmp.ne.s32.totalorder %s92, %s94
    %p98 = scmp.eq.s32.totalorder %s9, 0
    %p99 = por %p97, %p98
    %p100 = scmp.ne.s32.totalorder %s92, %s94
    %p101 = scmp.eq.s32.totalorder %s14, 1
    %p102 = por %p100, %p101
    %p103 = scmp.ne.s32.totalorder %s94, %s95
    %p104 = scmp.eq.s32.totalorder %s14, 0
    %p105 = por %p103, %p104
    %p106 = scmp.ne.s32.totalorder %s94, %s95
    %p107 = scmp.eq.s32.totalorder %s15, 1
    %p108 = por %p106, %p107
    %p110 = scmp.ne.s32.totalorder %s95, %s109
    %p111 = scmp.eq.s32.totalorder %s15, 0
    %p112 = por %p110, %p111
    %s113 = ssub.s32 %s16, %s35
    %s114 = ssub.s32 %s17, %s31
    %s115 = sor.u32 %s113, %s114
    %p116 = scmp.eq.s32.totalorder %s115, 0
    %s118 = sadd.s32 %s117, 1
    %s119 = scalar_select %p116, %s117, %s118
    %p122 = pneg %p116
    %p123 = scmp.eq.s32.totalorder %s9, 1
    %p124 = por %p122, %p123
    %p125 = scmp.ne.s32.totalorder %s117, %s120
    %p126 = scmp.eq.s32.totalorder %s9, 0
    %p127 = por %p125, %p126
    %p128 = scmp.ne.s32.totalorder %s117, %s120
    %p129 = scmp.eq.s32.totalorder %s14, 1
    %p130 = por %p128, %p129
    %p131 = scmp.ne.s32.totalorder %s120, %s121
    %p132 = scmp.eq.s32.totalorder %s14, 0
    %p133 = por %p131, %p132
    %p134 = scmp.ne.s32.totalorder %s120, %s121
    %p135 = scmp.eq.s32.totalorder %s15, 1
    %p136 = por %p134, %p135
    %p138 = scmp.ne.s32.totalorder %s121, %s137
    %p139 = scmp.eq.s32.totalorder %s15, 0
    %p140 = por %p138, %p139
    %p141 = scmp.le.s32.totalorder 1, %s9
    %p142 = scmp.lt.s32.totalorder %s9, 3
    %p143 = pnand %p141, %p142
    %p144 = pneg %p143
    // Predicated region
    $region9: #{discriminator_forward.6} parent=5 // pred_check
      _
    $region10: #{discriminator_forward.6} parent=5 // pred_check_branch
      %146 = sbr.rel (%p143) target = $region12
    $region11: #{discriminator_forward.6} parent=5 // pred_region
      %s147 = ssub.s32 %s9, 1
      // Predicated region
      $region13: #{discriminator_forward.6} parent=11 // pred_check
        %p148 = pneg %p84
      $region14: #{discriminator_forward.6} parent=11 // pred_check_branch
        %150 = sbr.rel (%p148) target = $region16
      $region15: #{discriminator_forward.6} parent=11 // pred_region
        %s151 = smul.u32 32, %s21
        %p152 = scmp.lt.s32.totalorder %s151, 31
        %s153 = scalar_select %p152, %s151, 31
        %s154 = smul.addr %s153, 4
        %s155 = scalar_lea.vmem %s1, %s154
        %s156 = smul.u32 32, %s21
      $region16: #{discriminator_forward.6} parent=11 // pred_fallthru
        _
      // Predicated region
      $region17: #{discriminator_forward.6} parent=11 // pred_check
        %p157 = pneg %p105
      $region18: #{discriminator_forward.6} parent=11 // pred_check_branch
        %159 = sbr.rel (%p157) target = $region20
      $region19: #{discriminator_forward.6} parent=11 // pred_region
        _
      $region20: #{discriminator_forward.6} parent=11 // pred_fallthru
        _
    $region12: #{discriminator_forward.6} parent=5 // pred_fallthru
      _
    %p160 = scmp.lt.s32.totalorder %s9, 2
    // Predicated region
    $region21: #{discriminator_forward.6} parent=5 // pred_check
      %p161 = pneg %p160
    $region22: #{discriminator_forward.6} parent=5 // pred_check_branch
      %163 = sbr.rel (%p161) target = $region24
    $region23: #{discriminator_forward.6} parent=5 // pred_region
      // Predicated region
      $region25: #{discriminator_forward.6} parent=23 // pred_check
        %p164 = pneg %p52
      $region26: #{discriminator_forward.6} parent=23 // pred_check_branch
        %166 = sbr.rel (%p164) target = $region28
      $region27: #{discriminator_forward.6} parent=23 // pred_region
        %s167 = smul.u32 2, %s17
        %s168 = smul.u32 2, %s18
        %p169 = scmp.lt.s32.totalorder %s16, 1
        %s170 = scalar_select %p169, %s16, 1
        %p171 = scmp.lt.s32.totalorder %s167, 1
        %s172 = scalar_select %p171, %s167, 1
        %p173 = scmp.lt.s32.totalorder %s168, 1
        %s174 = scalar_select %p173, %s168, 1
        %s175 = smul.addr %s172, 2
        %s176 = sadd.s32 %s174, %s175
        %s177 = smul.addr %s170, 4
        %s178 = sadd.s32 %s176, %s177
        %s179 = smul.addr %s178, 4
        %s180 = scalar_lea.vmem %s0, %s179
        %s181 = smul.u32 2, %s17
        %s182 = smul.u32 2, %s18
      $region28: #{discriminator_forward.6} parent=23 // pred_fallthru
        _
    $region24: #{discriminator_forward.6} parent=5 // pred_fallthru
      _
    %p183 = scmp.le.s32.totalorder 1, %s9
    %p184 = scmp.lt.s32.totalorder %s9, 3
    %p185 = pnand %p183, %p184
    %p186 = pneg %p185
    // Predicated region
    $region29: #{discriminator_forward.6} parent=5 // pred_check
      _
    $region30: #{discriminator_forward.6} parent=5 // pred_check_branch
      %188 = sbr.rel (%p185) target = $region32
    $region31: #{discriminator_forward.6} parent=5 // pred_region
      %s189 = ssub.s32 %s9, 1
      %s190 = smul.u32 2, %s20
      %s191 = smul.u32 2, %s21
      %p192 = scmp.lt.s32.totalorder %s19, 1
      %s193 = scalar_select %p192, %s19, 1
      %p194 = scmp.lt.s32.totalorder %s190, 1
      %s195 = scalar_select %p194, %s190, 1
      %p196 = scmp.lt.s32.totalorder %s191, 1
      %s197 = scalar_select %p196, %s191, 1
      %s198 = smul.addr %s195, 2
      %s199 = sadd.s32 %s197, %s198
      %s200 = smul.addr %s193, 4
      %s201 = sadd.s32 %s199, %s200
      %s202 = smul.addr %s201, 4
      %s203 = scalar_lea.vmem %s0, %s202
      %p204 = pneg %p58
      %p205 = pneg %p55
      %s206 = smul.u32 32, %s21
      %p207 = scmp.lt.s32.totalorder %s206, 31
      %s208 = scalar_select %p207, %s206, 31
      %s209 = smul.addr %s208, 4
      %s210 = scalar_lea.vmem %s1, %s209
      %p211 = pneg %p84
      %p212 = pneg %p81
      %p213 = pneg %p105
      %p214 = pneg %p102
      %p215 = pneg %p133
      %p216 = pneg %p130
      %s217 = smul.u32 2, %s20
      %p218 = scmp.lt.s32.totalorder %s19, 1
      %s219 = scalar_select %p218, %s19, 1
      %p220 = scmp.lt.s32.totalorder %s217, 1
      %s221 = scalar_select %p220, %s217, 1
      %s222 = smul.addr %s219, 2
      %s223 = sadd.s32 %s221, %s222
      %s224 = smul.addr %s223, 8
      %s225 = scalar_lea.vmem %s3, %s224
      %s226 = smul.u32 2, %s20
      %s227 = smul.u32 2, %s21
      %p228 = scmp.lt.s32.totalorder %s19, 1
      %s229 = scalar_select %p228, %s19, 1
      %p230 = scmp.lt.s32.totalorder %s226, 1
      %s231 = scalar_select %p230, %s226, 1
      %p232 = scmp.lt.s32.totalorder %s227, 1
      %s233 = scalar_select %p232, %s227, 1
      %s234 = smul.addr %s231, 2
      %s235 = sadd.s32 %s233, %s234
      %s236 = smul.addr %s229, 4
      %s237 = sadd.s32 %s235, %s236
      %s238 = smul.addr %s237, 4
      %s239 = scalar_lea.vmem %s0, %s238
      %s240 = smul.u32 2, %s20
      %s241 = smul.u32 2, %s21
      %s242 = smul.u32 32, %s21
      %p243 = scmp.lt.s32.totalorder %s242, 31
      %s244 = scalar_select %p243, %s242, 31
      %s245 = smul.addr %s244, 4
      %s246 = scalar_lea.vmem %s1, %s245
      %s247 = smul.u32 32, %s21
      %s248 = smul.u32 2, %s20
      %p249 = scmp.lt.s32.totalorder %s19, 1
      %s250 = scalar_select %p249, %s19, 1
      %p251 = scmp.lt.s32.totalorder %s248, 1
      %s252 = scalar_select %p251, %s248, 1
      %s253 = smul.addr %s250, 2
      %s254 = sadd.s32 %s252, %s253
      %s255 = smul.addr %s254, 8
      %s256 = scalar_lea.vmem %s3, %s255
      %s257 = smul.u32 2, %s20
      %p259 = scmp.eq.s32.totalorder %s21, 0
      // Predicated region
      $region33: #{discriminator_forward.6} parent=31 // pred_check
        %p260 = pneg %p259
      $region34: #{discriminator_forward.6} parent=31 // pred_check_branch
        %262 = sbr.rel (%p260) target = $region36
      $region35: #{discriminator_forward.6} parent=31 // pred_region
        %263 = vst [vmem:[#allocation2] sm:$0xff] 0.0
        %264 = vst [vmem:[#allocation2 + $0x8] sm:$0xff] 0.0
      $region36: #{discriminator_forward.6} parent=31 // pred_fallthru
        _
      %v265 = vld [vmem:[#allocation2] sm:$0xff]
      %v266 = vld [vmem:[#allocation2 + $0x8] sm:$0xff]
      %v267 = vld [vmem:[%s239] sm:$0xff]
      %v268 = vld [vmem:[%s239 + $0x8] sm:$0xff]
      %v269 = vld [vmem:[%s246] sm:$0xf]
      %v270 = vld [vmem:[%s246 + $0x4] sm:$0xf]
      %v271 = vld [vmem:[%s246 + $0x8] sm:$0xf]
      %v272 = vld [vmem:[%s246 + $0xc] sm:$0xf]
      %v273 = vld [vmem:[%s246 + $0x10] sm:$0xf]
      %v274 = vld [vmem:[%s246 + $0x14] sm:$0xf]
      %v275 = vld [vmem:[%s246 + $0x18] sm:$0xf]
      %v276 = vld [vmem:[%s246 + $0x1c] sm:$0xf]
      %v277 = vld [vmem:[%s246 + $0x20] sm:$0xf]
      %v278 = vld [vmem:[%s246 + $0x24] sm:$0xf]
      %v279 = vld [vmem:[%s246 + $0x28] sm:$0xf]
      %v280 = vld [vmem:[%s246 + $0x2c] sm:$0xf]
      %v281 = vld [vmem:[%s246 + $0x30] sm:$0xf]
      %v282 = vld [vmem:[%s246 + $0x34] sm:$0xf]
      %v283 = vld [vmem:[%s246 + $0x38] sm:$0xf]
      %v284 = vld [vmem:[%s246 + $0x3c] sm:$0xf]
      %v285 = vld [vmem:[%s246 + $0x40] sm:$0xf]
      %v286 = vld [vmem:[%s246 + $0x44] sm:$0xf]
      %v287 = vld [vmem:[%s246 + $0x48] sm:$0xf]
      %v288 = vld [vmem:[%s246 + $0x4c] sm:$0xf]
      %v289 = vld [vmem:[%s246 + $0x50] sm:$0xf]
      %v290 = vld [vmem:[%s246 + $0x54] sm:$0xf]
      %v291 = vld [vmem:[%s246 + $0x58] sm:$0xf]
      %v292 = vld [vmem:[%s246 + $0x5c] sm:$0xf]
      %v293 = vld [vmem:[%s246 + $0x60] sm:$0xf]
      %v294 = vld [vmem:[%s246 + $0x64] sm:$0xf]
      %v295 = vld [vmem:[%s246 + $0x68] sm:$0xf]
      %v296 = vld [vmem:[%s246 + $0x6c] sm:$0xf]
      %v297 = vld [vmem:[%s246 + $0x70] sm:$0xf]
      %v298 = vld [vmem:[%s246 + $0x74] sm:$0xf]
      %v299 = vld [vmem:[%s246 + $0x78] sm:$0xf]
      %v300 = vld [vmem:[%s246 + $0x7c] sm:$0xf]
      %v303 = vunpack.c.l.b16 %v267
      %v304 = vunpack.c.h.b16 %v267
      %v305 = vunpack.c.l.b16 %v268
      %v306 = vunpack.c.h.b16 %v268
      %v307 = vpack.c.b16 %v305, %v303
      %v308 = vpack.c.b16 %v306, %v304
      %v343 = vunpack.c.l.b16 %v269
      %v344 = vunpack.c.l.b16 %v270
      %v345 = vunpack.c.l.b16 %v271
      %v346 = vunpack.c.l.b16 %v272
      %v347 = vunpack.c.l.b16 %v273
      %v348 = vunpack.c.l.b16 %v274
      %v349 = vunpack.c.l.b16 %v275
      %v350 = vunpack.c.l.b16 %v276
      %v351 = vunpack.c.l.b16 %v277
      %v352 = vunpack.c.l.b16 %v278
      %v353 = vunpack.c.l.b16 %v279
      %v354 = vunpack.c.l.b16 %v280
      %v355 = vunpack.c.l.b16 %v281
      %v356 = vunpack.c.l.b16 %v282
      %v357 = vunpack.c.l.b16 %v283
      %v358 = vunpack.c.l.b16 %v284
      %v359 = vunpack.c.l.b16 %v285
      %v360 = vunpack.c.l.b16 %v286
      %v361 = vunpack.c.l.b16 %v287
      %v362 = vunpack.c.l.b16 %v288
      %v363 = vunpack.c.l.b16 %v289
      %v364 = vunpack.c.l.b16 %v290
      %v365 = vunpack.c.l.b16 %v291
      %v366 = vunpack.c.l.b16 %v292
      %v367 = vunpack.c.l.b16 %v293
      %v368 = vunpack.c.l.b16 %v294
      %v369 = vunpack.c.l.b16 %v295
      %v370 = vunpack.c.l.b16 %v296
      %v371 = vunpack.c.l.b16 %v297
      %v372 = vunpack.c.l.b16 %v298
      %v373 = vunpack.c.l.b16 %v299
      %v374 = vunpack.c.l.b16 %v300
      %v375 = vpack.c.b16 %v344, %v343
      %v376 = vpack.c.b16 %v346, %v345
      %v377 = vpack.c.b16 %v348, %v347
      %v378 = vpack.c.b16 %v350, %v349
      %v379 = vpack.c.b16 %v352, %v351
      %v380 = vpack.c.b16 %v354, %v353
      %v381 = vpack.c.b16 %v356, %v355
      %v382 = vpack.c.b16 %v358, %v357
      %v383 = vpack.c.b16 %v360, %v359
      %v384 = vpack.c.b16 %v362, %v361
      %v385 = vpack.c.b16 %v364, %v363
      %v386 = vpack.c.b16 %v366, %v365
      %v387 = vpack.c.b16 %v368, %v367
      %v388 = vpack.c.b16 %v370, %v369
      %v389 = vpack.c.b16 %v372, %v371
      %v390 = vpack.c.b16 %v374, %v373
      %407 = vmatprep.subr.bf16.mxu0 0
      %408 = vmatpush1.bf16.msra.mxu0 %v375
      %409 = vmatprep.subr.bf16.mxu0 0
      %410 = vmatpush1.bf16.msra.mxu0 %v376
      %411 = vmatprep.subr.bf16.mxu0 0
      %412 = vmatpush1.bf16.msra.mxu0 %v377
      %413 = vmatprep.subr.bf16.mxu0 0
      %414 = vmatpush1.bf16.msra.mxu0 %v378
      %415 = vmatprep.subr.bf16.mxu0 0
      %416 = vmatpush1.bf16.msra.mxu0 %v379
      %417 = vmatprep.subr.bf16.mxu0 0
      %418 = vmatpush1.bf16.msra.mxu0 %v380
      %419 = vmatprep.subr.bf16.mxu0 0
      %420 = vmatpush1.bf16.msra.mxu0 %v381
      %421 = vmatprep.subr.bf16.mxu0 0
      %422 = vmatpush1.bf16.msra.mxu0 %v382
      %423 = vmatprep.subr.bf16.mxu0 0
      %424 = vmatpush1.bf16.msra.mxu0 %v383
      %425 = vmatprep.subr.bf16.mxu0 0
      %426 = vmatpush1.bf16.msra.mxu0 %v384
      %427 = vmatprep.subr.bf16.mxu0 0
      %428 = vmatpush1.bf16.msra.mxu0 %v385
      %429 = vmatprep.subr.bf16.mxu0 0
      %430 = vmatpush1.bf16.msra.mxu0 %v386
      %431 = vmatprep.subr.bf16.mxu0 0
      %432 = vmatpush1.bf16.msra.mxu0 %v387
      %433 = vmatprep.subr.bf16.mxu0 0
      %434 = vmatpush1.bf16.msra.mxu0 %v388
      %435 = vmatprep.subr.bf16.mxu0 0
      %436 = vmatpush1.bf16.msra.mxu0 %v389
      %437 = vmatprep.subr.bf16.mxu0 0
      %438 = vmatpush1.bf16.msra.mxu0 %v390
      %439 = vmatprep.mubr.bf16.mxu0 %v308
      %440 = vmatmul.mubr.bf16.gmra.mrb[0].mxu0 %v307
      %v441 = vpop.f32.mrb[0].mxu0
      %v442 = vadd.f32 0.0, %v441
      %v443 = vpop.f32.mrb[0].mxu0
      %v444 = vpop.f32.mrb[0].mxu0
      %v445 = vadd.f32 0.0, %v444
      %v446 = vpop.f32.mrb[0].mxu0
      %447 = vdwg.mxu0
      %v448 = vadd.f32 %v265, %v442
      %v449 = vadd.f32 %v266, %v445
      %450 = vst [vmem:[#allocation2] sm:$0xff] %v448
      %451 = vst [vmem:[#allocation2 + $0x8] sm:$0xff] %v449
      // Predicated region
      $region37: #{discriminator_forward.6} parent=31 // pred_check
        %p452 = pneg %p259
      $region38: #{discriminator_forward.6} parent=31 // pred_check_branch
        %454 = sbr.rel (%p452) target = $region40
      $region39: #{discriminator_forward.6} parent=31 // pred_region
        %v455 = vld [vmem:[#allocation2] sm:$0xff]
        %v456 = vld [vmem:[#allocation2 + $0x8] sm:$0xff]
        %v457 = vld [vmem:[%s2] sm:$0x1]
        %v459 = vlaneseq
        %v460 = vshrl.u32 %v459, 7
        %v461 = vsub.s32 0, %v460
        %v462 = vrot.slane %v457, %v461
        %v464 = vadd.f32 %v455, %v462
        %v465 = vadd.f32 %v456, %v462
        %466 = vst [vmem:[%s256] sm:$0xff] %v464
        %467 = vst [vmem:[%s256 + $0x8] sm:$0xff] %v465
      $region40: #{discriminator_forward.6} parent=31 // pred_fallthru
        _
      %s468 = smul.u32 2, %s20
      %p469 = scmp.lt.s32.totalorder %s19, 1
      %s470 = scalar_select %p469, %s19, 1
      %p471 = scmp.lt.s32.totalorder %s468, 1
      %s472 = scalar_select %p471, %s468, 1
      %s473 = smul.addr %s470, 2
      %s474 = sadd.s32 %s472, %s473
      %s475 = smul.addr %s474, 8
      %s476 = scalar_lea.vmem %s3, %s475
      // Predicated region
      $region41: #{discriminator_forward.6} parent=31 // pred_check
        %p477 = pneg %p130
      $region42: #{discriminator_forward.6} parent=31 // pred_check_branch
        %479 = sbr.rel (%p477) target = $region44
      $region43: #{discriminator_forward.6} parent=31 // pred_region
        %s480 = smul.u32 2, %s20
      $region44: #{discriminator_forward.6} parent=31 // pred_fallthru
        _
    $region32: #{discriminator_forward.6} parent=5 // pred_fallthru
      _
    %p481 = scmp.le.s32.totalorder 2, %s9
    // Predicated region
    $region45: #{discriminator_forward.6} parent=5 // pred_check
      %p482 = pneg %p481
    $region46: #{discriminator_forward.6} parent=5 // pred_check_branch
      %484 = sbr.rel (%p482) target = $region48
    $region47: #{discriminator_forward.6} parent=5 // pred_region
      %s485 = ssub.s32 %s9, 2
      // Predicated region
      $region49: #{discriminator_forward.6} parent=47 // pred_check
        %p486 = pneg %p136
      $region50: #{discriminator_forward.6} parent=47 // pred_check_branch
        %488 = sbr.rel (%p486) target = $region52
      $region51: #{discriminator_forward.6} parent=47 // pred_region
        %s489 = smul.u32 2, %s23
        %p490 = scmp.lt.s32.totalorder %s22, 1
        %s491 = scalar_select %p490, %s22, 1
        %p492 = scmp.lt.s32.totalorder %s489, 1
        %s493 = scalar_select %p492, %s489, 1
        %s494 = smul.addr %s491, 2
        %s495 = sadd.s32 %s493, %s494
        %s496 = smul.addr %s495, 8
        %s497 = scalar_lea.vmem %s3, %s496
      $region52: #{discriminator_forward.6} parent=47 // pred_fallthru
        _
    $region48: #{discriminator_forward.6} parent=5 // pred_fallthru
      _
  $region6: #{discriminator_forward.6} parent=0 // loop_footer
    %s13 = sadd.s32 1, %s9
  $region7: #{discriminator_forward.6} parent=0 // loop_footer_branch
    %8 = sbr.rel target = $region3
  $region8: #{discriminator_forward.6} parent=0 // loop_exit
    _

</llo_original>
